<compile_context>
chip_gen: v5e
topology: v5e:2x2
jax: 0.10.0
libtpu: 0.0.40
codegen_flags: <defaults>
</compile_context>

<pallas_src>
import functools

import jax
import jax.numpy as jnp
from jax.experimental import pallas as pl
from jax.experimental.pallas import tpu as pltpu


# ---------------------------------------------------------------------------
# Shared conv epilogue: bias (f32) + optional ReLU + optional fused 2x2 maxpool.
# ---------------------------------------------------------------------------
def _conv_epilogue(y, b_ref, o_ref, apply_relu, apply_pool):
    y = y + b_ref[...]                                # (1, Cout) broadcasts over (H, W, Cout)
    if apply_relu:
        y = jnp.maximum(y, 0.0)
    if apply_pool:                                    # fused nn.MaxPool2d(2, 2)
        a = jnp.maximum(y[0::2, 0::2, :], y[0::2, 1::2, :])
        c = jnp.maximum(y[1::2, 0::2, :], y[1::2, 1::2, :])
        y = jnp.maximum(a, c)
    o_ref[0] = y.astype(o_ref.dtype)


# ---------------------------------------------------------------------------
# 3x3 conv (stride 1, padding 1), one batch element per grid step.
# im2col variant: one big MXU matmul with K = 9*Cin (used when Cin % 64 == 0).
# ---------------------------------------------------------------------------
def _conv3x3_im2col_kernel(x_ref, w_ref, b_ref, o_ref, *, H, W,
                           apply_relu, apply_pool):
    # x_ref: (1, H+2, W+2, Cin) zero-padded bf16 tile, w_ref: (9*Cin, Cout) bf16
    x = x_ref[0]                                      # (H+2, W+2, Cin)
    parts = [x[dh:dh + H, dw:dw + W, :] for dh in range(3) for dw in range(3)]
    patches = jnp.concatenate(parts, axis=-1)         # (H, W, 9*Cin) bf16
    y = jnp.einsum('hwk,kc->hwc', patches, w_ref[...],
                   preferred_element_type=jnp.float32)  # (H, W, Cout) f32
    _conv_epilogue(y, b_ref, o_ref, apply_relu, apply_pool)


# Fallback variant (Cin not lane-friendly, i.e. the 3-channel first layer):
# 9 small-K matmuls accumulated in f32 (proven lowering path).
def _conv3x3_taps_kernel(x_ref, w_ref, b_ref, o_ref, *, H, W,
                         apply_relu, apply_pool):
    # x_ref: (1, H+2, W+2, Cin), w_ref: (3, 3, Cin, Cout)
    cout = w_ref.shape[-1]
    x = x_ref[0]
    acc = jnp.zeros((H, W, cout), jnp.float32)
    for dh in range(3):
        for dw in range(3):
            acc = acc + jnp.einsum(
                'hwc,cd->hwd', x[dh:dh + H, dw:dw + W, :], w_ref[dh, dw],
                preferred_element_type=jnp.float32)
    _conv_epilogue(acc, b_ref, o_ref, apply_relu, apply_pool)


def conv3x3(x, w, b, *, apply_relu, apply_pool):
    # x: (N, H, W, Cin) bf16, w: (3, 3, Cin, Cout) bf16, b: (Cout,) f32
    N, H, W, Cin = x.shape
    Cout = w.shape[-1]
    # TODO(synk): handle the 1-pixel halo in-kernel (masked edge loads / spatial row
    # tiling) to avoid this extra padded HBM copy and to keep VMEM bounded at
    # ImageNet-scale resolutions; at these small shapes the whole image fits easily.
    xp = jnp.pad(x, ((0, 0), (1, 1), (1, 1), (0, 0)))
    Ho, Wo = (H // 2, W // 2) if apply_pool else (H, W)

    if Cin % 64 == 0:
        kern = functools.partial(_conv3x3_im2col_kernel, H=H, W=W,
                                 apply_relu=apply_relu, apply_pool=apply_pool)
        w_in = jnp.reshape(w, (9 * Cin, Cout))        # (dh, dw, cin)-major rows
        w_spec = pl.BlockSpec((9 * Cin, Cout), lambda n: (0, 0))
    else:
        kern = functools.partial(_conv3x3_taps_kernel, H=H, W=W,
                                 apply_relu=apply_relu, apply_pool=apply_pool)
        w_in = w
        w_spec = pl.BlockSpec((3, 3, Cin, Cout), lambda n: (0, 0, 0, 0))

    return pl.pallas_call(
        kern,
        out_shape=jax.ShapeDtypeStruct((N, Ho, Wo, Cout), x.dtype),
        grid=(N,),
        in_specs=[
            pl.BlockSpec((1, H + 2, W + 2, Cin), lambda n: (n, 0, 0, 0)),
            w_spec,
            pl.BlockSpec((1, Cout), lambda n: (0, 0)),
        ],
        out_specs=pl.BlockSpec((1, Ho, Wo, Cout), lambda n: (n, 0, 0, 0)),
        compiler_params=pltpu.CompilerParams(dimension_semantics=("parallel",)),
    )(xp, w_in, b.reshape(1, Cout))


# ---------------------------------------------------------------------------
# Linear (y = x @ W + b, W stored as (in, out)) with K-tiled f32 accumulation.
# ---------------------------------------------------------------------------
def _fc_kernel(x_ref, w_ref, b_ref, o_ref, acc_ref, *, apply_relu):
    k = pl.program_id(1)

    @pl.when(k == 0)
    def _():
        acc_ref[...] = jnp.zeros_like(acc_ref)

    acc_ref[...] += jnp.dot(x_ref[...], w_ref[...],
                            preferred_element_type=jnp.float32)

    @pl.when(k == pl.num_programs(1) - 1)
    def _():
        y = acc_ref[...] + b_ref[...]
        if apply_relu:
            y = jnp.maximum(y, 0.0)
        o_ref[...] = y.astype(o_ref.dtype)


def _largest_divisor(n, cap):
    t = min(n, cap)
    while n % t != 0:
        t -= 1
    return t


def linear(x, w, b, *, apply_relu, out_dtype=jnp.bfloat16):
    # x: (B, K) bf16, w: (K, N) bf16 (N pre-padded to a multiple of 128), b: (N,) f32
    B, K = x.shape
    N = w.shape[1]
    tn = _largest_divisor(N, 2048)                    # divisor-guarded tile sizes
    tk = _largest_divisor(K, 2048)
    kern = functools.partial(_fc_kernel, apply_relu=apply_relu)
    return pl.pallas_call(
        kern,
        out_shape=jax.ShapeDtypeStruct((B, N), out_dtype),
        grid=(N // tn, K // tk),
        in_specs=[
            pl.BlockSpec((B, tk), lambda j, k: (0, k)),
            pl.BlockSpec((tk, tn), lambda j, k: (k, j)),
            pl.BlockSpec((1, tn), lambda j, k: (0, j)),
        ],
        out_specs=pl.BlockSpec((B, tn), lambda j, k: (0, j)),
        scratch_shapes=[pltpu.VMEM((B, tn), jnp.float32)],
        compiler_params=pltpu.CompilerParams(
            dimension_semantics=("parallel", "arbitrary")),
    )(x, w, b.reshape(1, N))


# ---------------------------------------------------------------------------
# Deterministic synthetic parameters (shapes follow the nn.Module __init__).
# ---------------------------------------------------------------------------
def _round_up(n, m):
    return ((n + m - 1) // m) * m


def init_params(key, flatten_output, num_classes, final_hw):
    Hf, Wf = final_hw
    Cf = flatten_output // (Hf * Wf)

    def conv_p(k, cin, cout):
        k1, k2 = jax.random.split(k)
        scale = 1.0 / jnp.sqrt(cin * 9.0)
        w = (jax.random.normal(k1, (3, 3, cin, cout), jnp.float32) * scale
             ).astype(jnp.bfloat16)
        bb = jax.random.normal(k2, (cout,), jnp.float32) * 0.01
        return w, bb

    def fc_p(k, kin, kout, pad_to=None):
        k1, k2 = jax.random.split(k)
        scale = 1.0 / jnp.sqrt(float(kin))
        w = jax.random.normal(k1, (kin, kout), jnp.float32) * scale
        bb = jax.random.normal(k2, (kout,), jnp.float32) * 0.01
        if pad_to is not None and pad_to > kout:      # lane-pad classifier to 128
            w = jnp.pad(w, ((0, 0), (0, pad_to - kout)))
            bb = jnp.pad(bb, (0, pad_to - kout))
        return w.astype(jnp.bfloat16), bb

    keys = jax.random.split(key, 12)

    # fc1: generate rows in PyTorch CHW view() order, then fold the NCHW->NHWC
    # flatten permutation into the weight rows (so activations flatten as NHWC).
    w1, c1 = fc_p(keys[9], flatten_output, 4096)
    perm = jnp.transpose(
        jnp.arange(flatten_output).reshape(Cf, Hf, Wf), (1, 2, 0)).reshape(-1)
    w1 = w1[perm]

    params = {
        'b1': [conv_p(keys[0], 3, 64), conv_p(keys[1], 64, 64),
               conv_p(keys[2], 64, 64)],
        'b2': [conv_p(keys[3], 64, 128), conv_p(keys[4], 128, 128),
               conv_p(keys[5], 128, 128)],
        'b3': [conv_p(keys[6], 128, 256), conv_p(keys[7], 256, 256),
               conv_p(keys[8], 256, 256)],
        'fc1': (w1, c1),
        'fc2': fc_p(keys[10], 4096, 4096),
        'fc3': fc_p(keys[11], 4096, num_classes,
                    pad_to=_round_up(num_classes, 128)),
        'num_classes': num_classes,
    }
    return params


def vgg19_forward(params, x_nchw):
    # x_nchw: (N, 3, H, W) float32, matching PyTorch conv input convention.
    x = jnp.transpose(x_nchw, (0, 2, 3, 1)).astype(jnp.bfloat16)   # NCHW -> NHWC, bf16
    for blk in ('b1', 'b2', 'b3'):
        (w0, c0), (w1, c1), (w2, c2) = params[blk]
        x = conv3x3(x, w0, c0, apply_relu=False, apply_pool=False)  # Convolution.layer1
        x = conv3x3(x, w1, c1, apply_relu=True, apply_pool=False)
        x = conv3x3(x, w2, c2, apply_relu=True, apply_pool=True)    # conv+ReLU + fused MaxPool2d(2,2)
    # PyTorch's x.view(N, -1) (CHW order) is folded into fc1's rows at init time,
    # so the NHWC activation is flattened directly with no transpose.
    x = x.reshape(x.shape[0], -1)
    w, c = params['fc1']
    x = linear(x, w, c, apply_relu=True)
    # TODO(synk): nn.Dropout(p=0.5) is identity at inference; training-mode dropout not modeled.
    w, c = params['fc2']
    x = linear(x, w, c, apply_relu=True)
    w, c = params['fc3']
    x = linear(x, w, c, apply_relu=False, out_dtype=jnp.float32)
    return x[:, :params['num_classes']]               # drop the 128-lane padding


if __name__ == "__main__":
    key = jax.random.PRNGKey(0)
    k_x, k_p = jax.random.split(key)

    # Small, module-consistent shapes: batch=2, 3 input channels, 16x16 spatial.
    # After three 2x2 maxpools: 2x2 spatial, 256 channels -> flatten_output = 1024.
    N, H, W = 2, 16, 16
    Hf, Wf = H // 8, W // 8
    flatten_output = 256 * Hf * Wf
    num_classes = 10

    x = jax.random.normal(k_x, (N, 3, H, W), jnp.float32)
    params = init_params(k_p, flatten_output, num_classes, (Hf, Wf))

    out = vgg19_forward(params, x)
    out = jax.block_until_ready(out)
    assert out.shape == (N, num_classes), out.shape
    print("KERNEL_OK")
</pallas_src>

<mosaic_0001>
module attributes {stable_mosaic.version = 11 : i64} {
  func.func @_conv3x3_taps_kernel(%arg0: i32, %arg1: memref<1x18x18x3xbf16, #tpu.memory_space<vmem>>, %arg2: memref<3x3x3x64xbf16, #tpu.memory_space<vmem>>, %arg3: memref<1x64xf32, #tpu.memory_space<vmem>>, %arg4: memref<1x16x16x64xbf16, #tpu.memory_space<vmem>>) attributes {dimension_semantics = [#tpu.dimension_semantics<parallel>], iteration_bounds = array<i64: 2>, scalar_prefetch = 0 : i64, scratch_operands = 0 : i64, tpu.core_type = #tpu.core_type<tc>, window_params = [{transform_indices = @transform_0, window_bounds = array<i64: 1, 18, 18, 3>}, {pipeline_mode = #tpu.pipeline_mode<synchronous>, transform_indices = @transform_1, window_bounds = array<i64: 3, 3, 3, 64>}, {pipeline_mode = #tpu.pipeline_mode<synchronous>, transform_indices = @transform_2, window_bounds = array<i64: 1, 64>}, {transform_indices = @transform_3, window_bounds = array<i64: 1, 16, 16, 64>}]} {
    %c0 = arith.constant 0 : index
    %c0_0 = arith.constant 0 : index
    %c0_1 = arith.constant 0 : index
    %c0_2 = arith.constant 0 : index
    %0 = vector.load %arg1[%c0, %c0_0, %c0_1, %c0_2] : memref<1x18x18x3xbf16, #tpu.memory_space<vmem>>, vector<1x18x18x3xbf16>
    %1 = vector.shape_cast %0 : vector<1x18x18x3xbf16> to vector<18x18x3xbf16>
    %cst = arith.constant 0.000000e+00 : f32
    %2 = vector.broadcast %cst : f32 to vector<16x16x64xf32>
    %3 = vector.extract_strided_slice %1 {offsets = [0, 0, 0], sizes = [16, 16, 3], strides = [1, 1, 1]} : vector<18x18x3xbf16> to vector<16x16x3xbf16>
    %c0_3 = arith.constant 0 : index
    %c0_4 = arith.constant 0 : index
    %c0_5 = arith.constant 0 : index
    %c0_6 = arith.constant 0 : index
    %4 = vector.load %arg2[%c0_3, %c0_4, %c0_5, %c0_6] : memref<3x3x3x64xbf16, #tpu.memory_space<vmem>>, vector<1x1x3x64xbf16>
    %5 = vector.shape_cast %4 : vector<1x1x3x64xbf16> to vector<3x64xbf16>
    "tpu.trace_start"() <{level = 10 : i32, message = "hwc,cd->hwd"}> : () -> ()
    %cst_7 = arith.constant dense<0.000000e+00> : vector<16x16x64xf32>
    %6 = tpu.matmul %3, %5, %cst_7 {dimension_numbers = #tpu.dot_dimension_numbers<[2], [0], [0, 1], [1], [0, 0, 0, 1, 1, 1], [], []>} : vector<16x16x3xbf16>, vector<3x64xbf16>, vector<16x16x64xf32> -> vector<16x16x64xf32>
    "tpu.trace_stop"() : () -> ()
    %7 = arith.addf %2, %6 : vector<16x16x64xf32>
    %8 = vector.extract_strided_slice %1 {offsets = [0, 1, 0], sizes = [16, 16, 3], strides = [1, 1, 1]} : vector<18x18x3xbf16> to vector<16x16x3xbf16>
    %c0_8 = arith.constant 0 : index
    %c1 = arith.constant 1 : index
    %c0_9 = arith.constant 0 : index
    %c0_10 = arith.constant 0 : index
    %9 = vector.load %arg2[%c0_8, %c1, %c0_9, %c0_10] : memref<3x3x3x64xbf16, #tpu.memory_space<vmem>>, vector<1x1x3x64xbf16>
    %10 = vector.shape_cast %9 : vector<1x1x3x64xbf16> to vector<3x64xbf16>
    "tpu.trace_start"() <{level = 10 : i32, message = "hwc,cd->hwd"}> : () -> ()
    %cst_11 = arith.constant dense<0.000000e+00> : vector<16x16x64xf32>
    %11 = tpu.matmul %8, %10, %cst_11 {dimension_numbers = #tpu.dot_dimension_numbers<[2], [0], [0, 1], [1], [0, 0, 0, 1, 1, 1], [], []>} : vector<16x16x3xbf16>, vector<3x64xbf16>, vector<16x16x64xf32> -> vector<16x16x64xf32>
    "tpu.trace_stop"() : () -> ()
    %12 = arith.addf %7, %11 : vector<16x16x64xf32>
    %13 = vector.extract_strided_slice %1 {offsets = [0, 2, 0], sizes = [16, 16, 3], strides = [1, 1, 1]} : vector<18x18x3xbf16> to vector<16x16x3xbf16>
    %c0_12 = arith.constant 0 : index
    %c2 = arith.constant 2 : index
    %c0_13 = arith.constant 0 : index
    %c0_14 = arith.constant 0 : index
    %14 = vector.load %arg2[%c0_12, %c2, %c0_13, %c0_14] : memref<3x3x3x64xbf16, #tpu.memory_space<vmem>>, vector<1x1x3x64xbf16>
    %15 = vector.shape_cast %14 : vector<1x1x3x64xbf16> to vector<3x64xbf16>
    "tpu.trace_start"() <{level = 10 : i32, message = "hwc,cd->hwd"}> : () -> ()
    %cst_15 = arith.constant dense<0.000000e+00> : vector<16x16x64xf32>
    %16 = tpu.matmul %13, %15, %cst_15 {dimension_numbers = #tpu.dot_dimension_numbers<[2], [0], [0, 1], [1], [0, 0, 0, 1, 1, 1], [], []>} : vector<16x16x3xbf16>, vector<3x64xbf16>, vector<16x16x64xf32> -> vector<16x16x64xf32>
    "tpu.trace_stop"() : () -> ()
    %17 = arith.addf %12, %16 : vector<16x16x64xf32>
    %18 = vector.extract_strided_slice %1 {offsets = [1, 0, 0], sizes = [16, 16, 3], strides = [1, 1, 1]} : vector<18x18x3xbf16> to vector<16x16x3xbf16>
    %c1_16 = arith.constant 1 : index
    %c0_17 = arith.constant 0 : index
    %c0_18 = arith.constant 0 : index
    %c0_19 = arith.constant 0 : index
    %19 = vector.load %arg2[%c1_16, %c0_17, %c0_18, %c0_19] : memref<3x3x3x64xbf16, #tpu.memory_space<vmem>>, vector<1x1x3x64xbf16>
    %20 = vector.shape_cast %19 : vector<1x1x3x64xbf16> to vector<3x64xbf16>
    "tpu.trace_start"() <{level = 10 : i32, message = "hwc,cd->hwd"}> : () -> ()
    %cst_20 = arith.constant dense<0.000000e+00> : vector<16x16x64xf32>
    %21 = tpu.matmul %18, %20, %cst_20 {dimension_numbers = #tpu.dot_dimension_numbers<[2], [0], [0, 1], [1], [0, 0, 0, 1, 1, 1], [], []>} : vector<16x16x3xbf16>, vector<3x64xbf16>, vector<16x16x64xf32> -> vector<16x16x64xf32>
    "tpu.trace_stop"() : () -> ()
    %22 = arith.addf %17, %21 : vector<16x16x64xf32>
    %23 = vector.extract_strided_slice %1 {offsets = [1, 1, 0], sizes = [16, 16, 3], strides = [1, 1, 1]} : vector<18x18x3xbf16> to vector<16x16x3xbf16>
    %c1_21 = arith.constant 1 : index
    %c1_22 = arith.constant 1 : index
    %c0_23 = arith.constant 0 : index
    %c0_24 = arith.constant 0 : index
    %24 = vector.load %arg2[%c1_21, %c1_22, %c0_23, %c0_24] : memref<3x3x3x64xbf16, #tpu.memory_space<vmem>>, vector<1x1x3x64xbf16>
    %25 = vector.shape_cast %24 : vector<1x1x3x64xbf16> to vector<3x64xbf16>
    "tpu.trace_start"() <{level = 10 : i32, message = "hwc,cd->hwd"}> : () -> ()
    %cst_25 = arith.constant dense<0.000000e+00> : vector<16x16x64xf32>
    %26 = tpu.matmul %23, %25, %cst_25 {dimension_numbers = #tpu.dot_dimension_numbers<[2], [0], [0, 1], [1], [0, 0, 0, 1, 1, 1], [], []>} : vector<16x16x3xbf16>, vector<3x64xbf16>, vector<16x16x64xf32> -> vector<16x16x64xf32>
    "tpu.trace_stop"() : () -> ()
    %27 = arith.addf %22, %26 : vector<16x16x64xf32>
    %28 = vector.extract_strided_slice %1 {offsets = [1, 2, 0], sizes = [16, 16, 3], strides = [1, 1, 1]} : vector<18x18x3xbf16> to vector<16x16x3xbf16>
    %c1_26 = arith.constant 1 : index
    %c2_27 = arith.constant 2 : index
    %c0_28 = arith.constant 0 : index
    %c0_29 = arith.constant 0 : index
    %29 = vector.load %arg2[%c1_26, %c2_27, %c0_28, %c0_29] : memref<3x3x3x64xbf16, #tpu.memory_space<vmem>>, vector<1x1x3x64xbf16>
    %30 = vector.shape_cast %29 : vector<1x1x3x64xbf16> to vector<3x64xbf16>
    "tpu.trace_start"() <{level = 10 : i32, message = "hwc,cd->hwd"}> : () -> ()
    %cst_30 = arith.constant dense<0.000000e+00> : vector<16x16x64xf32>
    %31 = tpu.matmul %28, %30, %cst_30 {dimension_numbers = #tpu.dot_dimension_numbers<[2], [0], [0, 1], [1], [0, 0, 0, 1, 1, 1], [], []>} : vector<16x16x3xbf16>, vector<3x64xbf16>, vector<16x16x64xf32> -> vector<16x16x64xf32>
    "tpu.trace_stop"() : () -> ()
    %32 = arith.addf %27, %31 : vector<16x16x64xf32>
    %33 = vector.extract_strided_slice %1 {offsets = [2, 0, 0], sizes = [16, 16, 3], strides = [1, 1, 1]} : vector<18x18x3xbf16> to vector<16x16x3xbf16>
    %c2_31 = arith.constant 2 : index
    %c0_32 = arith.constant 0 : index
    %c0_33 = arith.constant 0 : index
    %c0_34 = arith.constant 0 : index
    %34 = vector.load %arg2[%c2_31, %c0_32, %c0_33, %c0_34] : memref<3x3x3x64xbf16, #tpu.memory_space<vmem>>, vector<1x1x3x64xbf16>
    %35 = vector.shape_cast %34 : vector<1x1x3x64xbf16> to vector<3x64xbf16>
    "tpu.trace_start"() <{level = 10 : i32, message = "hwc,cd->hwd"}> : () -> ()
    %cst_35 = arith.constant dense<0.000000e+00> : vector<16x16x64xf32>
    %36 = tpu.matmul %33, %35, %cst_35 {dimension_numbers = #tpu.dot_dimension_numbers<[2], [0], [0, 1], [1], [0, 0, 0, 1, 1, 1], [], []>} : vector<16x16x3xbf16>, vector<3x64xbf16>, vector<16x16x64xf32> -> vector<16x16x64xf32>
    "tpu.trace_stop"() : () -> ()
    %37 = arith.addf %32, %36 : vector<16x16x64xf32>
    %38 = vector.extract_strided_slice %1 {offsets = [2, 1, 0], sizes = [16, 16, 3], strides = [1, 1, 1]} : vector<18x18x3xbf16> to vector<16x16x3xbf16>
    %c2_36 = arith.constant 2 : index
    %c1_37 = arith.constant 1 : index
    %c0_38 = arith.constant 0 : index
    %c0_39 = arith.constant 0 : index
    %39 = vector.load %arg2[%c2_36, %c1_37, %c0_38, %c0_39] : memref<3x3x3x64xbf16, #tpu.memory_space<vmem>>, vector<1x1x3x64xbf16>
    %40 = vector.shape_cast %39 : vector<1x1x3x64xbf16> to vector<3x64xbf16>
    "tpu.trace_start"() <{level = 10 : i32, message = "hwc,cd->hwd"}> : () -> ()
    %cst_40 = arith.constant dense<0.000000e+00> : vector<16x16x64xf32>
    %41 = tpu.matmul %38, %40, %cst_40 {dimension_numbers = #tpu.dot_dimension_numbers<[2], [0], [0, 1], [1], [0, 0, 0, 1, 1, 1], [], []>} : vector<16x16x3xbf16>, vector<3x64xbf16>, vector<16x16x64xf32> -> vector<16x16x64xf32>
    "tpu.trace_stop"() : () -> ()
    %42 = arith.addf %37, %41 : vector<16x16x64xf32>
    %43 = vector.extract_strided_slice %1 {offsets = [2, 2, 0], sizes = [16, 16, 3], strides = [1, 1, 1]} : vector<18x18x3xbf16> to vector<16x16x3xbf16>
    %c2_41 = arith.constant 2 : index
    %c2_42 = arith.constant 2 : index
    %c0_43 = arith.constant 0 : index
    %c0_44 = arith.constant 0 : index
    %44 = vector.load %arg2[%c2_41, %c2_42, %c0_43, %c0_44] : memref<3x3x3x64xbf16, #tpu.memory_space<vmem>>, vector<1x1x3x64xbf16>
    %45 = vector.shape_cast %44 : vector<1x1x3x64xbf16> to vector<3x64xbf16>
    "tpu.trace_start"() <{level = 10 : i32, message = "hwc,cd->hwd"}> : () -> ()
    %cst_45 = arith.constant dense<0.000000e+00> : vector<16x16x64xf32>
    %46 = tpu.matmul %43, %45, %cst_45 {dimension_numbers = #tpu.dot_dimension_numbers<[2], [0], [0, 1], [1], [0, 0, 0, 1, 1, 1], [], []>} : vector<16x16x3xbf16>, vector<3x64xbf16>, vector<16x16x64xf32> -> vector<16x16x64xf32>
    "tpu.trace_stop"() : () -> ()
    %47 = arith.addf %42, %46 : vector<16x16x64xf32>
    %c0_46 = arith.constant 0 : index
    %c0_47 = arith.constant 0 : index
    %48 = vector.load %arg3[%c0_46, %c0_47] : memref<1x64xf32, #tpu.memory_space<vmem>>, vector<1x64xf32>
    %49 = vector.shape_cast %48 : vector<1x64xf32> to vector<1x1x64xf32>
    %50 = vector.broadcast %49 : vector<1x1x64xf32> to vector<16x16x64xf32>
    %51 = arith.addf %47, %50 : vector<16x16x64xf32>
    %52 = arith.truncf %51 : vector<16x16x64xf32> to vector<16x16x64xbf16>
    %c0_48 = arith.constant 0 : index
    %c0_49 = arith.constant 0 : index
    %c0_50 = arith.constant 0 : index
    %c0_51 = arith.constant 0 : index
    %53 = vector.load %arg4[%c0_48, %c0_49, %c0_50, %c0_51] : memref<1x16x16x64xbf16, #tpu.memory_space<vmem>>, vector<1x16x16x64xbf16>
    %54 = vector.shape_cast %53 : vector<1x16x16x64xbf16> to vector<16x16x64xbf16>
    %55 = vector.shape_cast %52 : vector<16x16x64xbf16> to vector<1x16x16x64xbf16>
    tpu.vector_store %arg4[%c0_48, %c0_49, %c0_50, %c0_51], %55 {strides = array<i32>} : memref<1x16x16x64xbf16, #tpu.memory_space<vmem>>, vector<1x16x16x64xbf16>,
    return
  }
  func.func @transform_0(%arg0: i32) -> (i32, i32, i32, i32) {
    %c0_i32 = arith.constant 0 : i32
    %c0_i32_0 = arith.constant 0 : i32
    %c0_i32_1 = arith.constant 0 : i32
    %c0_i32_2 = arith.constant 0 : i32
    return %arg0, %c0_i32, %c0_i32_0, %c0_i32_1 : i32, i32, i32, i32
  }
  func.func @transform_1(%arg0: i32) -> (i32, i32, i32, i32) {
    %c0_i32 = arith.constant 0 : i32
    %c0_i32_0 = arith.constant 0 : i32
    %c0_i32_1 = arith.constant 0 : i32
    %c0_i32_2 = arith.constant 0 : i32
    %c0_i32_3 = arith.constant 0 : i32
    return %c0_i32, %c0_i32_0, %c0_i32_1, %c0_i32_2 : i32, i32, i32, i32
  }
  func.func @transform_2(%arg0: i32) -> (i32, i32) {
    %c0_i32 = arith.constant 0 : i32
    %c0_i32_0 = arith.constant 0 : i32
    %c0_i32_1 = arith.constant 0 : i32
    return %c0_i32, %c0_i32_0 : i32, i32
  }
  func.func @transform_3(%arg0: i32) -> (i32, i32, i32, i32) {
    %c0_i32 = arith.constant 0 : i32
    %c0_i32_0 = arith.constant 0 : i32
    %c0_i32_1 = arith.constant 0 : i32
    %c0_i32_2 = arith.constant 0 : i32
    return %arg0, %c0_i32, %c0_i32_0, %c0_i32_1 : i32, i32, i32, i32
  }
}

</mosaic_0001>

<llo_original>
// kernel: tpu_custom_call.1
$region0: #{tpu_custom_call.1}
  #allocation0 [shape = 'u32[]', space=smem, size = 0x4, offset = 0x4, fixed_abs, tag = 'smem constant byte address 0x4 - core index']
  #allocation1 [shape = 'u32[72,128]{1,0:T(1,128)}', space=vmem, size = 0x9000, scoped, tag = 'internal scratch']
  %s0 = inlined_call_operand.vmem [shape: bf16[2,18,18,3], index: 0, kind: input, shape index: {}]
  %s1 = inlined_call_operand.vmem [shape: bf16[3,3,3,64], index: 1, kind: input, shape index: {}]
  %s2 = inlined_call_operand.vmem [shape: f32[1,64], index: 2, kind: input, shape index: {}]
  %s3 = inlined_call_operand.hbm [shape: bf16[2,16,16,64], index: 3, kind: output, shape index: {}]
  %s4 = sld [smem:[#allocation0]]
  $region45: #{tpu_custom_call.1} parent=0
    _
  %s6 = ssub.s32 1, %s4
  %s7 = scalar_select 0, %s6, %s4
  $region1: #{tpu_custom_call.1} parent=0
    #allocation2 [shape = 'u8[131072]{0}', space=vmem, size = 0x20000, scoped, tag = 'output window, operand 0']
    #allocation3 [shape = 's32[2]{0}', space=sflag, size = 0x8, scoped, tag = 'scoped memory for tpu_custom_call.1']
    %8 = vsyncpa [#allocation3], 0
    %s9 = scalar_lea.sflag [#allocation3], 1
    %10 = vsyncpa %s9, 0
    loop: start=0, step=1, limit=4
    $region2: #{tpu_custom_call.1} parent=1 // loop_pre_header
      _
    $region3: #{tpu_custom_call.1} parent=1 // loop_header
      %s12 = sphi 0, %s16
      %p13 = scmp.ge.s32.totalorder %s12, 4
      %s22 = sphi 0, %s24
      %s25 = sphi 0, %s22
      %s26 = sphi 0, %s25
      %s42 = sphi 0, %s26
      %s46 = sphi 0, %s46
      %s48 = sphi 0, %s46
      %s49 = sphi 0, %s48
      %s63 = sphi 0, %s49
      %s67 = sphi 0, %s67
      %s69 = sphi 0, %s67
      %s70 = sphi 0, %s69
      %s84 = sphi 0, %s70
      %s90 = sphi 0, %s92
      %s93 = sphi 0, %s90
      %s94 = sphi 0, %s93
      %s110 = sphi 0, %s94
    $region4: #{tpu_custom_call.1} parent=1 // loop_header_branch
      %15 = sbr.rel (%p13) target = $region8
    $region5: #{tpu_custom_call.1} parent=1 // loop_body
      %s17 = ssub.s32 %s12, 1
      %s18 = ssub.s32 %s12, 2
      %s19 = sadd.s32 %s12, 1
      %s20 = ssub.s32 %s12, %s19
      %p21 = scmp.eq.s32.totalorder %s20, 0
      %s23 = sadd.s32 %s22, 1
      %s24 = scalar_select %p21, %s22, %s23
      %p27 = pneg %p21
      %p28 = scmp.eq.s32.totalorder %s12, 1
      %p29 = por %p27, %p28
      %p30 = scmp.ne.s32.totalorder %s22, %s25
      %p31 = scmp.eq.s32.totalorder %s12, 0
      %p32 = por %p30, %p31
      %p33 = scmp.ne.s32.totalorder %s22, %s25
      %p34 = scmp.eq.s32.totalorder %s17, 1
      %p35 = por %p33, %p34
      %p36 = scmp.ne.s32.totalorder %s25, %s26
      %p37 = scmp.eq.s32.totalorder %s17, 0
      %p38 = por %p36, %p37
      %p39 = scmp.ne.s32.totalorder %s25, %s26
      %p40 = scmp.eq.s32.totalorder %s18, 1
      %p41 = por %p39, %p40
      %p43 = scmp.ne.s32.totalorder %s26, %s42
      %p44 = scmp.eq.s32.totalorder %s18, 0
      %p45 = por %p43, %p44
      %s47 = sadd.s32 %s46, 1
      %p50 = scmp.eq.s32.totalorder %s12, 1
      %p51 = scmp.ne.s32.totalorder %s46, %s48
      %p52 = scmp.eq.s32.totalorder %s12, 0
      %p53 = por %p51, %p52
      %p54 = scmp.ne.s32.totalorder %s46, %s48
      %p55 = scmp.eq.s32.totalorder %s17, 1
      %p56 = por %p54, %p55
      %p57 = scmp.ne.s32.totalorder %s48, %s49
      %p58 = scmp.eq.s32.totalorder %s17, 0
      %p59 = por %p57, %p58
      %p60 = scmp.ne.s32.totalorder %s48, %s49
      %p61 = scmp.eq.s32.totalorder %s18, 1
      %p62 = por %p60, %p61
      %p64 = scmp.ne.s32.totalorder %s49, %s63
      %p65 = scmp.eq.s32.totalorder %s18, 0
      %p66 = por %p64, %p65
      %s68 = sadd.s32 %s67, 1
      %p71 = scmp.eq.s32.totalorder %s12, 1
      %p72 = scmp.ne.s32.totalorder %s67, %s69
      %p73 = scmp.eq.s32.totalorder %s12, 0
      %p74 = por %p72, %p73
      %p75 = scmp.ne.s32.totalorder %s67, %s69
      %p76 = scmp.eq.s32.totalorder %s17, 1
      %p77 = por %p75, %p76
      %p78 = scmp.ne.s32.totalorder %s69, %s70
      %p79 = scmp.eq.s32.totalorder %s17, 0
      %p80 = por %p78, %p79
      %p81 = scmp.ne.s32.totalorder %s69, %s70
      %p82 = scmp.eq.s32.totalorder %s18, 1
      %p83 = por %p81, %p82
      %p85 = scmp.ne.s32.totalorder %s70, %s84
      %p86 = scmp.eq.s32.totalorder %s18, 0
      %p87 = por %p85, %p86
      %s88 = ssub.s32 %s12, %s19
      %p89 = scmp.eq.s32.totalorder %s88, 0
      %s91 = sadd.s32 %s90, 1
      %s92 = scalar_select %p89, %s90, %s91
      %p95 = pneg %p89
      %p96 = scmp.eq.s32.totalorder %s12, 1
      %p97 = por %p95, %p96
      %p98 = scmp.ne.s32.totalorder %s90, %s93
      %p99 = scmp.eq.s32.totalorder %s12, 0
      %p100 = por %p98, %p99
      %p101 = scmp.ne.s32.totalorder %s90, %s93
      %p102 = scmp.eq.s32.totalorder %s17, 1
      %p103 = por %p101, %p102
      %p104 = scmp.ne.s32.totalorder %s93, %s94
      %p105 = scmp.eq.s32.totalorder %s17, 0
      %p106 = por %p104, %p105
      %p107 = scmp.ne.s32.totalorder %s93, %s94
      %p108 = scmp.eq.s32.totalorder %s18, 1
      %p109 = por %p107, %p108
      %p111 = scmp.ne.s32.totalorder %s94, %s110
      %p112 = scmp.eq.s32.totalorder %s18, 0
      %p113 = por %p111, %p112
      %p114 = scmp.le.s32.totalorder 1, %s12
      %p115 = scmp.lt.s32.totalorder %s12, 3
      %p116 = pnand %p114, %p115
      %p117 = pneg %p116
      // Predicated region
      $region9: #{tpu_custom_call.1} parent=5 // pred_check
        _
      $region10: #{tpu_custom_call.1} parent=5 // pred_check_branch
        %119 = sbr.rel (%p116) target = $region12
      $region11: #{tpu_custom_call.1} parent=5 // pred_region
        %s120 = ssub.s32 %s12, 1
        // Predicated region
        $region13: #{tpu_custom_call.1} parent=11 // pred_check
          %p121 = pneg %p59
        $region14: #{tpu_custom_call.1} parent=11 // pred_check_branch
          %123 = sbr.rel (%p121) target = $region16
        $region15: #{tpu_custom_call.1} parent=11 // pred_region
          _
        $region16: #{tpu_custom_call.1} parent=11 // pred_fallthru
          _
        // Predicated region
        $region17: #{tpu_custom_call.1} parent=11 // pred_check
          %p124 = pneg %p80
        $region18: #{tpu_custom_call.1} parent=11 // pred_check_branch
          %126 = sbr.rel (%p124) target = $region20
        $region19: #{tpu_custom_call.1} parent=11 // pred_region
          _
        $region20: #{tpu_custom_call.1} parent=11 // pred_fallthru
          _
      $region12: #{tpu_custom_call.1} parent=5 // pred_fallthru
        _
      %p127 = scmp.lt.s32.totalorder %s12, 2
      // Predicated region
      $region21: #{tpu_custom_call.1} parent=5 // pred_check
        %p128 = pneg %p127
      $region22: #{tpu_custom_call.1} parent=5 // pred_check_branch
        %130 = sbr.rel (%p128) target = $region24
      $region23: #{tpu_custom_call.1} parent=5 // pred_region
        // Predicated region
        $region25: #{tpu_custom_call.1} parent=23 // pred_check
          %p131 = pneg %p32
        $region26: #{tpu_custom_call.1} parent=23 // pred_check_branch
          %133 = sbr.rel (%p131) target = $region28
        $region27: #{tpu_custom_call.1} parent=23 // pred_region
          %p134 = scmp.lt.s32.totalorder %s12, 1
          %s135 = scalar_select %p134, %s12, 1
          %s136 = smul.addr %s135, 54
          %s137 = smul.addr %s136, 4
          %s138 = scalar_lea.vmem %s0, %s137
        $region28: #{tpu_custom_call.1} parent=23 // pred_fallthru
          _
      $region24: #{tpu_custom_call.1} parent=5 // pred_fallthru
        _
      %p139 = scmp.le.s32.totalorder 1, %s12
      %p140 = scmp.lt.s32.totalorder %s12, 3
      %p141 = pnand %p139, %p140
      %p142 = pneg %p141
      // Predicated region
      $region29: #{tpu_custom_call.1} parent=5 // pred_check
        _
      $region30: #{tpu_custom_call.1} parent=5 // pred_check_branch
        %144 = sbr.rel (%p141) target = $region32
      $region31: #{tpu_custom_call.1} parent=5 // pred_region
        %s145 = ssub.s32 %s12, 1
        %p146 = scmp.lt.s32.totalorder %s17, 1
        %s147 = scalar_select %p146, %s17, 1
        %s148 = smul.addr %s147, 54
        %s149 = smul.addr %s148, 4
        %s150 = scalar_lea.vmem %s0, %s149
        %p151 = pneg %p38
        %p152 = pneg %p35
        %p153 = pneg %p59
        %p154 = pneg %p56
        %p155 = pneg %p80
        %p156 = pneg %p77
        %p157 = pneg %p106
        %p158 = pneg %p103
        %s159 = sand.u32 %s93, 1
        %s160 = scalar_lea.sflag [#allocation3], %s159
        %s161 = sand.u32 %s93, 1
        %s162 = smul.addr %s161, 128
        %s163 = scalar_lea.vmem [#allocation2], %s162
        %p164 = scmp.lt.s32.totalorder %s17, 1
        %s165 = scalar_select %p164, %s17, 1
        %s166 = smul.addr %s165, 54
        %s167 = smul.addr %s166, 4
        %s168 = scalar_lea.vmem %s0, %s167
        %v170 = vld [vmem:[%s168] sm:$0xf]
        %v171 = vld [vmem:[%s168 + $0x4] sm:$0xf]
        %v172 = vld [vmem:[%s168 + $0x8] sm:$0x1]
        %v173 = vld [vmem:[%s168 + $0xc] sm:$0xf]
        %v174 = vld [vmem:[%s168 + $0x10] sm:$0xf]
        %v175 = vld [vmem:[%s168 + $0x14] sm:$0x1]
        %v176 = vld [vmem:[%s168 + $0x18] sm:$0xf]
        %v177 = vld [vmem:[%s168 + $0x1c] sm:$0xf]
        %v178 = vld [vmem:[%s168 + $0x20] sm:$0x1]
        %v179 = vld [vmem:[%s168 + $0x24] sm:$0xf]
        %v180 = vld [vmem:[%s168 + $0x28] sm:$0xf]
        %v181 = vld [vmem:[%s168 + $0x2c] sm:$0x1]
        %v182 = vld [vmem:[%s168 + $0x30] sm:$0xf]
        %v183 = vld [vmem:[%s168 + $0x34] sm:$0xf]
        %v184 = vld [vmem:[%s168 + $0x38] sm:$0x1]
        %v185 = vld [vmem:[%s168 + $0x3c] sm:$0xf]
        %v186 = vld [vmem:[%s168 + $0x40] sm:$0xf]
        %v187 = vld [vmem:[%s168 + $0x44] sm:$0x1]
        %v188 = vld [vmem:[%s168 + $0x48] sm:$0xf]
        %v189 = vld [vmem:[%s168 + $0x4c] sm:$0xf]
        %v190 = vld [vmem:[%s168 + $0x50] sm:$0x1]
        %v191 = vld [vmem:[%s168 + $0x54] sm:$0xf]
        %v192 = vld [vmem:[%s168 + $0x58] sm:$0xf]
        %v193 = vld [vmem:[%s168 + $0x5c] sm:$0x1]
        %v194 = vld [vmem:[%s168 + $0x60] sm:$0xf]
        %v195 = vld [vmem:[%s168 + $0x64] sm:$0xf]
        %v196 = vld [vmem:[%s168 + $0x68] sm:$0x1]
        %v197 = vld [vmem:[%s168 + $0x6c] sm:$0xf]
        %v198 = vld [vmem:[%s168 + $0x70] sm:$0xf]
        %v199 = vld [vmem:[%s168 + $0x74] sm:$0x1]
        %v200 = vld [vmem:[%s168 + $0x78] sm:$0xf]
        %v201 = vld [vmem:[%s168 + $0x7c] sm:$0xf]
        %v202 = vld [vmem:[%s168 + $0x80] sm:$0x1]
        %v203 = vld [vmem:[%s168 + $0x84] sm:$0xf]
        %v204 = vld [vmem:[%s168 + $0x88] sm:$0xf]
        %v205 = vld [vmem:[%s168 + $0x8c] sm:$0x1]
        %v206 = vld [vmem:[%s168 + $0x90] sm:$0xf]
        %v207 = vld [vmem:[%s168 + $0x94] sm:$0xf]
        %v208 = vld [vmem:[%s168 + $0x98] sm:$0x1]
        %v209 = vld [vmem:[%s168 + $0x9c] sm:$0xf]
        %v210 = vld [vmem:[%s168 + $0xa0] sm:$0xf]
        %v211 = vld [vmem:[%s168 + $0xa4] sm:$0x1]
        %v212 = vld [vmem:[%s168 + $0xa8] sm:$0xf]
        %v213 = vld [vmem:[%s168 + $0xac] sm:$0xf]
        %v214 = vld [vmem:[%s168 + $0xb0] sm:$0x1]
        %v215 = vld [vmem:[%s168 + $0xb4] sm:$0xf]
        %v216 = vld [vmem:[%s168 + $0xb8] sm:$0xf]
        %v217 = vld [vmem:[%s168 + $0xbc] sm:$0x1]
        %v218 = vld [vmem:[%s168 + $0xc0] sm:$0xf]
        %v219 = vld [vmem:[%s168 + $0xc4] sm:$0xf]
        %v220 = vld [vmem:[%s168 + $0xc8] sm:$0x1]
        %v221 = vld [vmem:[%s168 + $0xcc] sm:$0xf]
        %v222 = vld [vmem:[%s168 + $0xd0] sm:$0xf]
        %v223 = vld [vmem:[%s168 + $0xd4] sm:$0x1]
        %v224 = vld [vmem:[%s1] sm:$0x3]
        %s225 = scalar_lea.vmem %s1, 2
        %v226 = vld [vmem:[%s225] sm:$0x3]
        %vm227 = vsmask.f32 3328
        %vm228 = vsmask.f32 7440
        %vm229 = vmor %vm227, %vm228
        %v231 = vshrl.u32 %v170, 16
        %v233 = vrot.slane %v231, 4
        %v234 = vshll.u32 %v170, 16
        %v236 = vrot.slane %v234, 5
        %v237 = vor.u32 %v233, %v236
        %v238 = vrot.slane %v237, 4
        %v240 = vshll.u32 %v171, 16
        %v242 = vrot.slane %v240, 5
        %v243 = vsel %vm229, %v238, %v242
        %v244 = vshrl.u32 %v171, 16
        %v246 = vrot.slane %v244, 4
        %v247 = vor.u32 %v246, %v242
        %v248 = vrot.slane %v247, 4
        %v250 = vshll.u32 %v172, 16
        %v252 = vrot.slane %v250, 5
        %v253 = vsel %vm229, %v248, %v252
        %v255 = vshrl.u32 %v173, 16
        %v257 = vrot.slane %v255, 4
        %v258 = vshll.u32 %v173, 16
        %v260 = vrot.slane %v258, 5
        %v261 = vor.u32 %v257, %v260
        %v262 = vrot.slane %v261, 4
        %v264 = vshll.u32 %v174, 16
        %v266 = vrot.slane %v264, 5
        %v267 = vsel %vm229, %v262, %v266
        %v268 = vshrl.u32 %v174, 16
        %v270 = vrot.slane %v268, 4
        %v271 = vor.u32 %v270, %v266
        %v272 = vrot.slane %v271, 4
        %v274 = vshll.u32 %v175, 16
        %v276 = vrot.slane %v274, 5
        %v277 = vsel %vm229, %v272, %v276
        %v279 = vshrl.u32 %v176, 16
        %v281 = vrot.slane %v279, 4
        %v282 = vshll.u32 %v176, 16
        %v284 = vrot.slane %v282, 5
        %v285 = vor.u32 %v281, %v284
        %v286 = vrot.slane %v285, 4
        %v288 = vshll.u32 %v177, 16
        %v290 = vrot.slane %v288, 5
        %v291 = vsel %vm229, %v286, %v290
        %v292 = vshrl.u32 %v177, 16
        %v294 = vrot.slane %v292, 4
        %v295 = vor.u32 %v294, %v290
        %v296 = vrot.slane %v295, 4
        %v298 = vshll.u32 %v178, 16
        %v300 = vrot.slane %v298, 5
        %v301 = vsel %vm229, %v296, %v300
        %v303 = vshrl.u32 %v179, 16
        %v305 = vrot.slane %v303, 4
        %v306 = vshll.u32 %v179, 16
        %v308 = vrot.slane %v306, 5
        %v309 = vor.u32 %v305, %v308
        %v310 = vrot.slane %v309, 4
        %v312 = vshll.u32 %v180, 16
        %v314 = vrot.slane %v312, 5
        %v315 = vsel %vm229, %v310, %v314
        %v316 = vshrl.u32 %v180, 16
        %v318 = vrot.slane %v316, 4
        %v319 = vor.u32 %v318, %v314
        %v320 = vrot.slane %v319, 4
        %v322 = vshll.u32 %v181, 16
        %v324 = vrot.slane %v322, 5
        %v325 = vsel %vm229, %v320, %v324
        %v327 = vshrl.u32 %v182, 16
        %v329 = vrot.slane %v327, 4
        %v330 = vshll.u32 %v182, 16
        %v332 = vrot.slane %v330, 5
        %v333 = vor.u32 %v329, %v332
        %v334 = vrot.slane %v333, 4
        %v336 = vshll.u32 %v183, 16
        %v338 = vrot.slane %v336, 5
        %v339 = vsel %vm229, %v334, %v338
        %v340 = vshrl.u32 %v183, 16
        %v342 = vrot.slane %v340, 4
        %v343 = vor.u32 %v342, %v338
        %v344 = vrot.slane %v343, 4
        %v346 = vshll.u32 %v184, 16
        %v348 = vrot.slane %v346, 5
        %v349 = vsel %vm229, %v344, %v348
        %v351 = vshrl.u32 %v185, 16
        %v353 = vrot.slane %v351, 4
        %v354 = vshll.u32 %v185, 16
        %v356 = vrot.slane %v354, 5
        %v357 = vor.u32 %v353, %v356
        %v358 = vrot.slane %v357, 4
        %v360 = vshll.u32 %v186, 16
        %v362 = vrot.slane %v360, 5
        %v363 = vsel %vm229, %v358, %v362
        %v364 = vshrl.u32 %v186, 16
        %v366 = vrot.slane %v364, 4
        %v367 = vor.u32 %v366, %v362
        %v368 = vrot.slane %v367, 4
        %v370 = vshll.u32 %v187, 16
        %v372 = vrot.slane %v370, 5
        %v373 = vsel %vm229, %v368, %v372
        %v375 = vshrl.u32 %v188, 16
        %v377 = vrot.slane %v375, 4
        %v378 = vshll.u32 %v188, 16
        %v380 = vrot.slane %v378, 5
        %v381 = vor.u32 %v377, %v380
        %v382 = vrot.slane %v381, 4
        %v384 = vshll.u32 %v189, 16
        %v386 = vrot.slane %v384, 5
        %v387 = vsel %vm229, %v382, %v386
        %v388 = vshrl.u32 %v189, 16
        %v390 = vrot.slane %v388, 4
        %v391 = vor.u32 %v390, %v386
        %v392 = vrot.slane %v391, 4
        %v394 = vshll.u32 %v190, 16
        %v396 = vrot.slane %v394, 5
        %v397 = vsel %vm229, %v392, %v396
        %v399 = vshrl.u32 %v191, 16
        %v401 = vrot.slane %v399, 4
        %v402 = vshll.u32 %v191, 16
        %v404 = vrot.slane %v402, 5
        %v405 = vor.u32 %v401, %v404
        %v406 = vrot.slane %v405, 4
        %v408 = vshll.u32 %v192, 16
        %v410 = vrot.slane %v408, 5
        %v411 = vsel %vm229, %v406, %v410
        %v412 = vshrl.u32 %v192, 16
        %v414 = vrot.slane %v412, 4
        %v415 = vor.u32 %v414, %v410
        %v416 = vrot.slane %v415, 4
        %v418 = vshll.u32 %v193, 16
        %v420 = vrot.slane %v418, 5
        %v421 = vsel %vm229, %v416, %v420
        %v423 = vshrl.u32 %v194, 16
        %v425 = vrot.slane %v423, 4
        %v426 = vshll.u32 %v194, 16
        %v428 = vrot.slane %v426, 5
        %v429 = vor.u32 %v425, %v428
        %v430 = vrot.slane %v429, 4
        %v432 = vshll.u32 %v195, 16
        %v434 = vrot.slane %v432, 5
        %v435 = vsel %vm229, %v430, %v434
        %v436 = vshrl.u32 %v195, 16
        %v438 = vrot.slane %v436, 4
        %v439 = vor.u32 %v438, %v434
        %v440 = vrot.slane %v439, 4
        %v442 = vshll.u32 %v196, 16
        %v444 = vrot.slane %v442, 5
        %v445 = vsel %vm229, %v440, %v444
        %v447 = vshrl.u32 %v197, 16
        %v449 = vrot.slane %v447, 4
        %v450 = vshll.u32 %v197, 16
        %v452 = vrot.slane %v450, 5
        %v453 = vor.u32 %v449, %v452
        %v454 = vrot.slane %v453, 4
        %v456 = vshll.u32 %v198, 16
        %v458 = vrot.slane %v456, 5
        %v459 = vsel %vm229, %v454, %v458
        %v460 = vshrl.u32 %v198, 16
        %v462 = vrot.slane %v460, 4
        %v463 = vor.u32 %v462, %v458
        %v464 = vrot.slane %v463, 4
        %v466 = vshll.u32 %v199, 16
        %v468 = vrot.slane %v466, 5
        %v469 = vsel %vm229, %v464, %v468
        %v471 = vshrl.u32 %v200, 16
        %v473 = vrot.slane %v471, 4
        %v474 = vshll.u32 %v200, 16
        %v476 = vrot.slane %v474, 5
        %v477 = vor.u32 %v473, %v476
        %v478 = vrot.slane %v477, 4
        %v480 = vshll.u32 %v201, 16
        %v482 = vrot.slane %v480, 5
        %v483 = vsel %vm229, %v478, %v482
        %v484 = vshrl.u32 %v201, 16
        %v486 = vrot.slane %v484, 4
        %v487 = vor.u32 %v486, %v482
        %v488 = vrot.slane %v487, 4
        %v490 = vshll.u32 %v202, 16
        %v492 = vrot.slane %v490, 5
        %v493 = vsel %vm229, %v488, %v492
        %v495 = vshrl.u32 %v203, 16
        %v497 = vrot.slane %v495, 4
        %v498 = vshll.u32 %v203, 16
        %v500 = vrot.slane %v498, 5
        %v501 = vor.u32 %v497, %v500
        %v502 = vrot.slane %v501, 4
        %v504 = vshll.u32 %v204, 16
        %v506 = vrot.slane %v504, 5
        %v507 = vsel %vm229, %v502, %v506
        %v508 = vshrl.u32 %v204, 16
        %v510 = vrot.slane %v508, 4
        %v511 = vor.u32 %v510, %v506
        %v512 = vrot.slane %v511, 4
        %v514 = vshll.u32 %v205, 16
        %v516 = vrot.slane %v514, 5
        %v517 = vsel %vm229, %v512, %v516
        %v519 = vshrl.u32 %v206, 16
        %v521 = vrot.slane %v519, 4
        %v522 = vshll.u32 %v206, 16
        %v524 = vrot.slane %v522, 5
        %v525 = vor.u32 %v521, %v524
        %v526 = vrot.slane %v525, 4
        %v528 = vshll.u32 %v207, 16
        %v530 = vrot.slane %v528, 5
        %v531 = vsel %vm229, %v526, %v530
        %v532 = vshrl.u32 %v207, 16
        %v534 = vrot.slane %v532, 4
        %v535 = vor.u32 %v534, %v530
        %v536 = vrot.slane %v535, 4
        %v538 = vshll.u32 %v208, 16
        %v540 = vrot.slane %v538, 5
        %v541 = vsel %vm229, %v536, %v540
        %v543 = vshrl.u32 %v209, 16
        %v545 = vrot.slane %v543, 4
        %v546 = vshll.u32 %v209, 16
        %v548 = vrot.slane %v546, 5
        %v549 = vor.u32 %v545, %v548
        %v550 = vrot.slane %v549, 4
        %v552 = vshll.u32 %v210, 16
        %v554 = vrot.slane %v552, 5
        %v555 = vsel %vm229, %v550, %v554
        %v556 = vshrl.u32 %v210, 16
        %v558 = vrot.slane %v556, 4
        %v559 = vor.u32 %v558, %v554
        %v560 = vrot.slane %v559, 4
        %v562 = vshll.u32 %v211, 16
        %v564 = vrot.slane %v562, 5
        %v565 = vsel %vm229, %v560, %v564
        %v567 = vshrl.u32 %v212, 16
        %v569 = vrot.slane %v567, 4
        %v570 = vshll.u32 %v212, 16
        %v572 = vrot.slane %v570, 5
        %v573 = vor.u32 %v569, %v572
        %v574 = vrot.slane %v573, 4
        %v576 = vshll.u32 %v213, 16
        %v578 = vrot.slane %v576, 5
        %v579 = vsel %vm229, %v574, %v578
        %v580 = vshrl.u32 %v213, 16
        %v582 = vrot.slane %v580, 4
        %v583 = vor.u32 %v582, %v578
        %v584 = vrot.slane %v583, 4
        %v586 = vshll.u32 %v214, 16
        %v588 = vrot.slane %v586, 5
        %v589 = vsel %vm229, %v584, %v588
        %v591 = vshrl.u32 %v215, 16
        %v593 = vrot.slane %v591, 4
        %v594 = vshll.u32 %v215, 16
        %v596 = vrot.slane %v594, 5
        %v597 = vor.u32 %v593, %v596
        %v598 = vrot.slane %v597, 4
        %v600 = vshll.u32 %v216, 16
        %v602 = vrot.slane %v600, 5
        %v603 = vsel %vm229, %v598, %v602
        %v604 = vshrl.u32 %v216, 16
        %v606 = vrot.slane %v604, 4
        %v607 = vor.u32 %v606, %v602
        %v608 = vrot.slane %v607, 4
        %v610 = vshll.u32 %v217, 16
        %v612 = vrot.slane %v610, 5
        %v613 = vsel %vm229, %v608, %v612
        %v614 = vunpack.c.l.b16 %v243
        %v615 = vunpack.c.l.b16 %v253
        %v616 = vunpack.c.l.b16 %v267
        %v617 = vunpack.c.l.b16 %v277
        %v618 = vunpack.c.l.b16 %v291
        %v619 = vunpack.c.l.b16 %v301
        %v620 = vunpack.c.l.b16 %v315
        %v621 = vunpack.c.l.b16 %v325
        %v622 = vunpack.c.l.b16 %v339
        %v623 = vunpack.c.l.b16 %v349
        %v624 = vunpack.c.l.b16 %v363
        %v625 = vunpack.c.l.b16 %v373
        %v626 = vunpack.c.l.b16 %v387
        %v627 = vunpack.c.l.b16 %v397
        %v628 = vunpack.c.l.b16 %v411
        %v629 = vunpack.c.l.b16 %v421
        %v630 = vunpack.c.l.b16 %v435
        %v631 = vunpack.c.l.b16 %v445
        %v632 = vunpack.c.l.b16 %v459
        %v633 = vunpack.c.l.b16 %v469
        %v634 = vunpack.c.l.b16 %v483
        %v635 = vunpack.c.l.b16 %v493
        %v636 = vunpack.c.l.b16 %v507
        %v637 = vunpack.c.l.b16 %v517
        %v638 = vunpack.c.l.b16 %v531
        %v639 = vunpack.c.l.b16 %v541
        %v640 = vunpack.c.l.b16 %v555
        %v641 = vunpack.c.l.b16 %v565
        %v642 = vunpack.c.l.b16 %v579
        %v643 = vunpack.c.l.b16 %v589
        %v644 = vunpack.c.l.b16 %v603
        %v645 = vunpack.c.l.b16 %v613
        %v646 = vpack.c.b16 %v615, %v614
        %v647 = vpack.c.b16 %v617, %v616
        %v648 = vpack.c.b16 %v619, %v618
        %v649 = vpack.c.b16 %v621, %v620
        %v650 = vpack.c.b16 %v623, %v622
        %v651 = vpack.c.b16 %v625, %v624
        %v652 = vpack.c.b16 %v627, %v626
        %v653 = vpack.c.b16 %v629, %v628
        %v654 = vpack.c.b16 %v631, %v630
        %v655 = vpack.c.b16 %v633, %v632
        %v656 = vpack.c.b16 %v635, %v634
        %v657 = vpack.c.b16 %v637, %v636
        %v658 = vpack.c.b16 %v639, %v638
        %v659 = vpack.c.b16 %v641, %v640
        %v660 = vpack.c.b16 %v643, %v642
        %v661 = vpack.c.b16 %v645, %v644
        %vm662 = vcmask 23552
        %v664 = vsel %vm662, %v646, 0
        %v667 = vsel %vm662, %v647, 0
        %v670 = vsel %vm662, %v648, 0
        %v673 = vsel %vm662, %v649, 0
        %v676 = vsel %vm662, %v650, 0
        %v679 = vsel %vm662, %v651, 0
        %v682 = vsel %vm662, %v652, 0
        %v685 = vsel %vm662, %v653, 0
        %v688 = vsel %vm662, %v654, 0
        %v691 = vsel %vm662, %v655, 0
        %v694 = vsel %vm662, %v656, 0
        %v697 = vsel %vm662, %v657, 0
        %v700 = vsel %vm662, %v658, 0
        %v703 = vsel %vm662, %v659, 0
        %v706 = vsel %vm662, %v660, 0
        %v709 = vsel %vm662, %v661, 0
        %vm711 = vcmask 1040384
        %vm712 = vcmask 1041408
        %v713 = vsel %vm711, 4294967295, 65535
        %v714 = vsel %vm712, %v713, 0
        %v716 = vand.u32 %v226, %v714
        %718 = vmatpush.bf16.msra.mxu0 0
        %719 = vmatpush.bf16.msra.mxu0 0
        %720 = vmatpush.bf16.msra.mxu0 0
        %721 = vmatpush.bf16.msra.mxu0 0
        %722 = vmatpush.bf16.msra.mxu0 0
        %723 = vmatpush.bf16.msra.mxu0 0
        %724 = vmatpush.bf16.msra.mxu0 0
        %725 = vmatpush.bf16.msra.mxu0 %v716
        %726 = vmatmul.bf16.gmra.mxu0 %v664
        %v727 = vpop.f32.mrf.mxu0
        %v728 = vadd.f32 0.0, %v727
        %v729 = vpop.f32.mrf.mxu0
        %v730 = vadd.f32 0.0, %v729
        %731 = vmatmul.bf16.gmra.mxu0 %v667
        %v732 = vpop.f32.mrf.mxu0
        %v733 = vadd.f32 0.0, %v732
        %v734 = vpop.f32.mrf.mxu0
        %v735 = vadd.f32 0.0, %v734
        %736 = vmatmul.bf16.gmra.mxu0 %v670
        %v737 = vpop.f32.mrf.mxu0
        %v738 = vadd.f32 0.0, %v737
        %v739 = vpop.f32.mrf.mxu0
        %v740 = vadd.f32 0.0, %v739
        %741 = vmatmul.bf16.gmra.mxu0 %v673
        %v742 = vpop.f32.mrf.mxu0
        %v743 = vadd.f32 0.0, %v742
        %v744 = vpop.f32.mrf.mxu0
        %v745 = vadd.f32 0.0, %v744
        %746 = vmatmul.bf16.gmra.mxu0 %v676
        %v747 = vpop.f32.mrf.mxu0
        %v748 = vadd.f32 0.0, %v747
        %v749 = vpop.f32.mrf.mxu0
        %v750 = vadd.f32 0.0, %v749
        %751 = vmatmul.bf16.gmra.mxu0 %v679
        %v752 = vpop.f32.mrf.mxu0
        %v753 = vadd.f32 0.0, %v752
        %v754 = vpop.f32.mrf.mxu0
        %v755 = vadd.f32 0.0, %v754
        %756 = vmatmul.bf16.gmra.mxu0 %v682
        %v757 = vpop.f32.mrf.mxu0
        %v758 = vadd.f32 0.0, %v757
        %v759 = vpop.f32.mrf.mxu0
        %v760 = vadd.f32 0.0, %v759
        %761 = vmatmul.bf16.gmra.mxu0 %v685
        %v762 = vpop.f32.mrf.mxu0
        %v763 = vadd.f32 0.0, %v762
        %v764 = vpop.f32.mrf.mxu0
        %v765 = vadd.f32 0.0, %v764
        %766 = vmatmul.bf16.gmra.mxu0 %v688
        %v767 = vpop.f32.mrf.mxu0
        %v768 = vadd.f32 0.0, %v767
        %v769 = vpop.f32.mrf.mxu0
        %v770 = vadd.f32 0.0, %v769
        %771 = vmatmul.bf16.gmra.mxu0 %v691
        %v772 = vpop.f32.mrf.mxu0
        %v773 = vadd.f32 0.0, %v772
        %v774 = vpop.f32.mrf.mxu0
        %v775 = vadd.f32 0.0, %v774
        %776 = vmatmul.bf16.gmra.mxu0 %v694
        %v777 = vpop.f32.mrf.mxu0
        %v778 = vadd.f32 0.0, %v777
        %v779 = vpop.f32.mrf.mxu0
        %v780 = vadd.f32 0.0, %v779
        %781 = vmatmul.bf16.gmra.mxu0 %v697
        %v782 = vpop.f32.mrf.mxu0
        %v783 = vadd.f32 0.0, %v782
        %v784 = vpop.f32.mrf.mxu0
        %v785 = vadd.f32 0.0, %v784
        %786 = vmatmul.bf16.gmra.mxu0 %v700
        %v787 = vpop.f32.mrf.mxu0
        %v788 = vadd.f32 0.0, %v787
        %v789 = vpop.f32.mrf.mxu0
        %v790 = vadd.f32 0.0, %v789
        %791 = vmatmul.bf16.gmra.mxu0 %v703
        %v792 = vpop.f32.mrf.mxu0
        %v793 = vadd.f32 0.0, %v792
        %v794 = vpop.f32.mrf.mxu0
        %v795 = vadd.f32 0.0, %v794
        %796 = vmatmul.bf16.gmra.mxu0 %v706
        %v797 = vpop.f32.mrf.mxu0
        %v798 = vadd.f32 0.0, %v797
        %v799 = vpop.f32.mrf.mxu0
        %v800 = vadd.f32 0.0, %v799
        %801 = vmatmul.bf16.gmra.mxu0 %v709
        %v802 = vpop.f32.mrf.mxu0
        %v803 = vadd.f32 0.0, %v802
        %v804 = vpop.f32.mrf.mxu0
        %v805 = vadd.f32 0.0, %v804
        %806 = vdwg.mxu0
        %v839 = vunpack.c.l.b16 %v170
        %v840 = vunpack.c.l.b16 %v171
        %v841 = vunpack.c.l.b16 %v173
        %v842 = vunpack.c.l.b16 %v174
        %v843 = vunpack.c.l.b16 %v176
        %v844 = vunpack.c.l.b16 %v177
        %v845 = vunpack.c.l.b16 %v179
        %v846 = vunpack.c.l.b16 %v180
        %v847 = vunpack.c.l.b16 %v182
        %v848 = vunpack.c.l.b16 %v183
        %v849 = vunpack.c.l.b16 %v185
        %v850 = vunpack.c.l.b16 %v186
        %v851 = vunpack.c.l.b16 %v188
        %v852 = vunpack.c.l.b16 %v189
        %v853 = vunpack.c.l.b16 %v191
        %v854 = vunpack.c.l.b16 %v192
        %v855 = vunpack.c.l.b16 %v194
        %v856 = vunpack.c.l.b16 %v195
        %v857 = vunpack.c.l.b16 %v197
        %v858 = vunpack.c.l.b16 %v198
        %v859 = vunpack.c.l.b16 %v200
        %v860 = vunpack.c.l.b16 %v201
        %v861 = vunpack.c.l.b16 %v203
        %v862 = vunpack.c.l.b16 %v204
        %v863 = vunpack.c.l.b16 %v206
        %v864 = vunpack.c.l.b16 %v207
        %v865 = vunpack.c.l.b16 %v209
        %v866 = vunpack.c.l.b16 %v210
        %v867 = vunpack.c.l.b16 %v212
        %v868 = vunpack.c.l.b16 %v213
        %v869 = vunpack.c.l.b16 %v215
        %v870 = vunpack.c.l.b16 %v216
        %v871 = vpack.c.b16 %v840, %v839
        %v872 = vpack.c.b16 %v842, %v841
        %v873 = vpack.c.b16 %v844, %v843
        %v874 = vpack.c.b16 %v846, %v845
        %v875 = vpack.c.b16 %v848, %v847
        %v876 = vpack.c.b16 %v850, %v849
        %v877 = vpack.c.b16 %v852, %v851
        %v878 = vpack.c.b16 %v854, %v853
        %v879 = vpack.c.b16 %v856, %v855
        %v880 = vpack.c.b16 %v858, %v857
        %v881 = vpack.c.b16 %v860, %v859
        %v882 = vpack.c.b16 %v862, %v861
        %v883 = vpack.c.b16 %v864, %v863
        %v884 = vpack.c.b16 %v866, %v865
        %v885 = vpack.c.b16 %v868, %v867
        %v886 = vpack.c.b16 %v870, %v869
        %v888 = vsel %vm662, %v871, 0
        %v891 = vsel %vm662, %v872, 0
        %v894 = vsel %vm662, %v873, 0
        %v897 = vsel %vm662, %v874, 0
        %v900 = vsel %vm662, %v875, 0
        %v903 = vsel %vm662, %v876, 0
        %v906 = vsel %vm662, %v877, 0
        %v909 = vsel %vm662, %v878, 0
        %v912 = vsel %vm662, %v879, 0
        %v915 = vsel %vm662, %v880, 0
        %v918 = vsel %vm662, %v881, 0
        %v921 = vsel %vm662, %v882, 0
        %v924 = vsel %vm662, %v883, 0
        %v927 = vsel %vm662, %v884, 0
        %v930 = vsel %vm662, %v885, 0
        %v933 = vsel %vm662, %v886, 0
        %v936 = vand.u32 %v224, %v714
        %938 = vmatpush.bf16.msra.mxu0 0
        %939 = vmatpush.bf16.msra.mxu0 0
        %940 = vmatpush.bf16.msra.mxu0 0
        %941 = vmatpush.bf16.msra.mxu0 0
        %942 = vmatpush.bf16.msra.mxu0 0
        %943 = vmatpush.bf16.msra.mxu0 0
        %944 = vmatpush.bf16.msra.mxu0 0
        %945 = vmatpush.bf16.msra.mxu0 %v936
        %946 = vmatmul.bf16.gmra.mxu0 %v888
        %v947 = vpop.f32.mrf.mxu0
        %v948 = vadd.f32 %v728, %v947
        %v949 = vpop.f32.mrf.mxu0
        %v950 = vadd.f32 %v730, %v949
        %951 = vmatmul.bf16.gmra.mxu0 %v891
        %v952 = vpop.f32.mrf.mxu0
        %v953 = vadd.f32 %v733, %v952
        %v954 = vpop.f32.mrf.mxu0
        %v955 = vadd.f32 %v735, %v954
        %956 = vmatmul.bf16.gmra.mxu0 %v894
        %v957 = vpop.f32.mrf.mxu0
        %v958 = vadd.f32 %v738, %v957
        %v959 = vpop.f32.mrf.mxu0
        %v960 = vadd.f32 %v740, %v959
        %961 = vmatmul.bf16.gmra.mxu0 %v897
        %v962 = vpop.f32.mrf.mxu0
        %v963 = vadd.f32 %v743, %v962
        %v964 = vpop.f32.mrf.mxu0
        %v965 = vadd.f32 %v745, %v964
        %966 = vmatmul.bf16.gmra.mxu0 %v900
        %v967 = vpop.f32.mrf.mxu0
        %v968 = vadd.f32 %v748, %v967
        %v969 = vpop.f32.mrf.mxu0
        %v970 = vadd.f32 %v750, %v969
        %971 = vmatmul.bf16.gmra.mxu0 %v903
        %v972 = vpop.f32.mrf.mxu0
        %v973 = vadd.f32 %v753, %v972
        %v974 = vpop.f32.mrf.mxu0
        %v975 = vadd.f32 %v755, %v974
        %976 = vmatmul.bf16.gmra.mxu0 %v906
        %v977 = vpop.f32.mrf.mxu0
        %v978 = vadd.f32 %v758, %v977
        %v979 = vpop.f32.mrf.mxu0
        %v980 = vadd.f32 %v760, %v979
        %981 = vmatmul.bf16.gmra.mxu0 %v909
        %v982 = vpop.f32.mrf.mxu0
        %v983 = vadd.f32 %v763, %v982
        %v984 = vpop.f32.mrf.mxu0
        %v985 = vadd.f32 %v765, %v984
        %986 = vmatmul.bf16.gmra.mxu0 %v912
        %v987 = vpop.f32.mrf.mxu0
        %v988 = vadd.f32 %v768, %v987
        %v989 = vpop.f32.mrf.mxu0
        %v990 = vadd.f32 %v770, %v989
        %991 = vmatmul.bf16.gmra.mxu0 %v915
        %v992 = vpop.f32.mrf.mxu0
        %v993 = vadd.f32 %v773, %v992
        %v994 = vpop.f32.mrf.mxu0
        %v995 = vadd.f32 %v775, %v994
        %996 = vmatmul.bf16.gmra.mxu0 %v918
        %v997 = vpop.f32.mrf.mxu0
        %v998 = vadd.f32 %v778, %v997
        %v999 = vpop.f32.mrf.mxu0
        %v1000 = vadd.f32 %v780, %v999
        %1001 = vmatmul.bf16.gmra.mxu0 %v921
        %v1002 = vpop.f32.mrf.mxu0
        %v1003 = vadd.f32 %v783, %v1002
        %v1004 = vpop.f32.mrf.mxu0
        %v1005 = vadd.f32 %v785, %v1004
        %1006 = vmatmul.bf16.gmra.mxu0 %v924
        %v1007 = vpop.f32.mrf.mxu0
        %v1008 = vadd.f32 %v788, %v1007
        %v1009 = vpop.f32.mrf.mxu0
        %v1010 = vadd.f32 %v790, %v1009
        %1011 = vmatmul.bf16.gmra.mxu0 %v927
        %v1012 = vpop.f32.mrf.mxu0
        %v1013 = vadd.f32 %v793, %v1012
        %v1014 = vpop.f32.mrf.mxu0
        %v1015 = vadd.f32 %v795, %v1014
        %1016 = vmatmul.bf16.gmra.mxu0 %v930
        %v1017 = vpop.f32.mrf.mxu0
        %v1018 = vadd.f32 %v798, %v1017
        %v1019 = vpop.f32.mrf.mxu0
        %v1020 = vadd.f32 %v800, %v1019
        %1021 = vmatmul.bf16.gmra.mxu0 %v933
        %v1022 = vpop.f32.mrf.mxu0
        %v1023 = vadd.f32 %v803, %v1022
        %v1024 = vpop.f32.mrf.mxu0
        %v1025 = vadd.f32 %v805, %v1024
        %1026 = vdwg.mxu0
        %s1027 = scalar_lea.vmem %s1, 4
        %v1028 = vld [vmem:[%s1027] sm:$0x3]
        %vm1045 = vcmask 1042432
        %vm1046 = vcmask 1046532
        %vm1047 = vmor %vm1045, %vm1046
        %v1048 = vrot.slane %v170, 5
        %v1049 = vrot.slane %v1048, 4
        %v1050 = vrot.slane %v171, 5
        %v1051 = vsel %vm1047, %v1049, %v1050
        %v1052 = vrot.slane %v1050, 4
        %v1053 = vrot.slane %v172, 5
        %v1054 = vsel %vm1047, %v1052, %v1053
        %v1055 = vrot.slane %v173, 5
        %v1056 = vrot.slane %v1055, 4
        %v1057 = vrot.slane %v174, 5
        %v1058 = vsel %vm1047, %v1056, %v1057
        %v1059 = vrot.slane %v1057, 4
        %v1060 = vrot.slane %v175, 5
        %v1061 = vsel %vm1047, %v1059, %v1060
        %v1062 = vrot.slane %v176, 5
        %v1063 = vrot.slane %v1062, 4
        %v1064 = vrot.slane %v177, 5
        %v1065 = vsel %vm1047, %v1063, %v1064
        %v1066 = vrot.slane %v1064, 4
        %v1067 = vrot.slane %v178, 5
        %v1068 = vsel %vm1047, %v1066, %v1067
        %v1069 = vrot.slane %v179, 5
        %v1070 = vrot.slane %v1069, 4
        %v1071 = vrot.slane %v180, 5
        %v1072 = vsel %vm1047, %v1070, %v1071
        %v1073 = vrot.slane %v1071, 4
        %v1074 = vrot.slane %v181, 5
        %v1075 = vsel %vm1047, %v1073, %v1074
        %v1076 = vrot.slane %v182, 5
        %v1077 = vrot.slane %v1076, 4
        %v1078 = vrot.slane %v183, 5
        %v1079 = vsel %vm1047, %v1077, %v1078
        %v1080 = vrot.slane %v1078, 4
        %v1081 = vrot.slane %v184, 5
        %v1082 = vsel %vm1047, %v1080, %v1081
        %v1083 = vrot.slane %v185, 5
        %v1084 = vrot.slane %v1083, 4
        %v1085 = vrot.slane %v186, 5
        %v1086 = vsel %vm1047, %v1084, %v1085
        %v1087 = vrot.slane %v1085, 4
        %v1088 = vrot.slane %v187, 5
        %v1089 = vsel %vm1047, %v1087, %v1088
        %v1090 = vrot.slane %v188, 5
        %v1091 = vrot.slane %v1090, 4
        %v1092 = vrot.slane %v189, 5
        %v1093 = vsel %vm1047, %v1091, %v1092
        %v1094 = vrot.slane %v1092, 4
        %v1095 = vrot.slane %v190, 5
        %v1096 = vsel %vm1047, %v1094, %v1095
        %v1097 = vrot.slane %v191, 5
        %v1098 = vrot.slane %v1097, 4
        %v1099 = vrot.slane %v192, 5
        %v1100 = vsel %vm1047, %v1098, %v1099
        %v1101 = vrot.slane %v1099, 4
        %v1102 = vrot.slane %v193, 5
        %v1103 = vsel %vm1047, %v1101, %v1102
        %v1104 = vrot.slane %v194, 5
        %v1105 = vrot.slane %v1104, 4
        %v1106 = vrot.slane %v195, 5
        %v1107 = vsel %vm1047, %v1105, %v1106
        %v1108 = vrot.slane %v1106, 4
        %v1109 = vrot.slane %v196, 5
        %v1110 = vsel %vm1047, %v1108, %v1109
        %v1111 = vrot.slane %v197, 5
        %v1112 = vrot.slane %v1111, 4
        %v1113 = vrot.slane %v198, 5
        %v1114 = vsel %vm1047, %v1112, %v1113
        %v1115 = vrot.slane %v1113, 4
        %v1116 = vrot.slane %v199, 5
        %v1117 = vsel %vm1047, %v1115, %v1116
        %v1118 = vrot.slane %v200, 5
        %v1119 = vrot.slane %v1118, 4
        %v1120 = vrot.slane %v201, 5
        %v1121 = vsel %vm1047, %v1119, %v1120
        %v1122 = vrot.slane %v1120, 4
        %v1123 = vrot.slane %v202, 5
        %v1124 = vsel %vm1047, %v1122, %v1123
        %v1125 = vrot.slane %v203, 5
        %v1126 = vrot.slane %v1125, 4
        %v1127 = vrot.slane %v204, 5
        %v1128 = vsel %vm1047, %v1126, %v1127
        %v1129 = vrot.slane %v1127, 4
        %v1130 = vrot.slane %v205, 5
        %v1131 = vsel %vm1047, %v1129, %v1130
        %v1132 = vrot.slane %v206, 5
        %v1133 = vrot.slane %v1132, 4
        %v1134 = vrot.slane %v207, 5
        %v1135 = vsel %vm1047, %v1133, %v1134
        %v1136 = vrot.slane %v1134, 4
        %v1137 = vrot.slane %v208, 5
        %v1138 = vsel %vm1047, %v1136, %v1137
        %v1139 = vrot.slane %v209, 5
        %v1140 = vrot.slane %v1139, 4
        %v1141 = vrot.slane %v210, 5
        %v1142 = vsel %vm1047, %v1140, %v1141
        %v1143 = vrot.slane %v1141, 4
        %v1144 = vrot.slane %v211, 5
        %v1145 = vsel %vm1047, %v1143, %v1144
        %v1146 = vrot.slane %v212, 5
        %v1147 = vrot.slane %v1146, 4
        %v1148 = vrot.slane %v213, 5
        %v1149 = vsel %vm1047, %v1147, %v1148
        %v1150 = vrot.slane %v1148, 4
        %v1151 = vrot.slane %v214, 5
        %v1152 = vsel %vm1047, %v1150, %v1151
        %v1153 = vrot.slane %v215, 5
        %v1154 = vrot.slane %v1153, 4
        %v1155 = vrot.slane %v216, 5
        %v1156 = vsel %vm1047, %v1154, %v1155
        %v1157 = vrot.slane %v1155, 4
        %v1158 = vrot.slane %v217, 5
        %v1159 = vsel %vm1047, %v1157, %v1158
        %v1160 = vunpack.c.l.b16 %v1051
        %v1161 = vunpack.c.l.b16 %v1054
        %v1162 = vunpack.c.l.b16 %v1058
        %v1163 = vunpack.c.l.b16 %v1061
        %v1164 = vunpack.c.l.b16 %v1065
        %v1165 = vunpack.c.l.b16 %v1068
        %v1166 = vunpack.c.l.b16 %v1072
        %v1167 = vunpack.c.l.b16 %v1075
        %v1168 = vunpack.c.l.b16 %v1079
        %v1169 = vunpack.c.l.b16 %v1082
        %v1170 = vunpack.c.l.b16 %v1086
        %v1171 = vunpack.c.l.b16 %v1089
        %v1172 = vunpack.c.l.b16 %v1093
        %v1173 = vunpack.c.l.b16 %v1096
        %v1174 = vunpack.c.l.b16 %v1100
        %v1175 = vunpack.c.l.b16 %v1103
        %v1176 = vunpack.c.l.b16 %v1107
        %v1177 = vunpack.c.l.b16 %v1110
        %v1178 = vunpack.c.l.b16 %v1114
        %v1179 = vunpack.c.l.b16 %v1117
        %v1180 = vunpack.c.l.b16 %v1121
        %v1181 = vunpack.c.l.b16 %v1124
        %v1182 = vunpack.c.l.b16 %v1128
        %v1183 = vunpack.c.l.b16 %v1131
        %v1184 = vunpack.c.l.b16 %v1135
        %v1185 = vunpack.c.l.b16 %v1138
        %v1186 = vunpack.c.l.b16 %v1142
        %v1187 = vunpack.c.l.b16 %v1145
        %v1188 = vunpack.c.l.b16 %v1149
        %v1189 = vunpack.c.l.b16 %v1152
        %v1190 = vunpack.c.l.b16 %v1156
        %v1191 = vunpack.c.l.b16 %v1159
        %v1192 = vpack.c.b16 %v1161, %v1160
        %v1193 = vpack.c.b16 %v1163, %v1162
        %v1194 = vpack.c.b16 %v1165, %v1164
        %v1195 = vpack.c.b16 %v1167, %v1166
        %v1196 = vpack.c.b16 %v1169, %v1168
        %v1197 = vpack.c.b16 %v1171, %v1170
        %v1198 = vpack.c.b16 %v1173, %v1172
        %v1199 = vpack.c.b16 %v1175, %v1174
        %v1200 = vpack.c.b16 %v1177, %v1176
        %v1201 = vpack.c.b16 %v1179, %v1178
        %v1202 = vpack.c.b16 %v1181, %v1180
        %v1203 = vpack.c.b16 %v1183, %v1182
        %v1204 = vpack.c.b16 %v1185, %v1184
        %v1205 = vpack.c.b16 %v1187, %v1186
        %v1206 = vpack.c.b16 %v1189, %v1188
        %v1207 = vpack.c.b16 %v1191, %v1190
        %v1209 = vsel %vm662, %v1192, 0
        %v1212 = vsel %vm662, %v1193, 0
        %v1215 = vsel %vm662, %v1194, 0
        %v1218 = vsel %vm662, %v1195, 0
        %v1221 = vsel %vm662, %v1196, 0
        %v1224 = vsel %vm662, %v1197, 0
        %v1227 = vsel %vm662, %v1198, 0
        %v1230 = vsel %vm662, %v1199, 0
        %v1233 = vsel %vm662, %v1200, 0
        %v1236 = vsel %vm662, %v1201, 0
        %v1239 = vsel %vm662, %v1202, 0
        %v1242 = vsel %vm662, %v1203, 0
        %v1245 = vsel %vm662, %v1204, 0
        %v1248 = vsel %vm662, %v1205, 0
        %v1251 = vsel %vm662, %v1206, 0
        %v1254 = vsel %vm662, %v1207, 0
        %v1257 = vand.u32 %v1028, %v714
        %1259 = vmatpush.bf16.msra.mxu0 0
        %1260 = vmatpush.bf16.msra.mxu0 0
        %1261 = vmatpush.bf16.msra.mxu0 0
        %1262 = vmatpush.bf16.msra.mxu0 0
        %1263 = vmatpush.bf16.msra.mxu0 0
        %1264 = vmatpush.bf16.msra.mxu0 0
        %1265 = vmatpush.bf16.msra.mxu0 0
        %1266 = vmatpush.bf16.msra.mxu0 %v1257
        %1267 = vmatmul.bf16.gmra.mxu0 %v1209
        %v1268 = vpop.f32.mrf.mxu0
        %v1269 = vadd.f32 0.0, %v1268
        %v1270 = vpop.f32.mrf.mxu0
        %v1271 = vadd.f32 0.0, %v1270
        %1272 = vmatmul.bf16.gmra.mxu0 %v1212
        %v1273 = vpop.f32.mrf.mxu0
        %v1274 = vadd.f32 0.0, %v1273
        %v1275 = vpop.f32.mrf.mxu0
        %v1276 = vadd.f32 0.0, %v1275
        %1277 = vmatmul.bf16.gmra.mxu0 %v1215
        %v1278 = vpop.f32.mrf.mxu0
        %v1279 = vadd.f32 0.0, %v1278
        %v1280 = vpop.f32.mrf.mxu0
        %v1281 = vadd.f32 0.0, %v1280
        %1282 = vmatmul.bf16.gmra.mxu0 %v1218
        %v1283 = vpop.f32.mrf.mxu0
        %v1284 = vadd.f32 0.0, %v1283
        %v1285 = vpop.f32.mrf.mxu0
        %v1286 = vadd.f32 0.0, %v1285
        %1287 = vmatmul.bf16.gmra.mxu0 %v1221
        %v1288 = vpop.f32.mrf.mxu0
        %v1289 = vadd.f32 0.0, %v1288
        %v1290 = vpop.f32.mrf.mxu0
        %v1291 = vadd.f32 0.0, %v1290
        %1292 = vmatmul.bf16.gmra.mxu0 %v1224
        %v1293 = vpop.f32.mrf.mxu0
        %v1294 = vadd.f32 0.0, %v1293
        %v1295 = vpop.f32.mrf.mxu0
        %v1296 = vadd.f32 0.0, %v1295
        %1297 = vmatmul.bf16.gmra.mxu0 %v1227
        %v1298 = vpop.f32.mrf.mxu0
        %v1299 = vadd.f32 0.0, %v1298
        %v1300 = vpop.f32.mrf.mxu0
        %v1301 = vadd.f32 0.0, %v1300
        %1302 = vmatmul.bf16.gmra.mxu0 %v1230
        %v1303 = vpop.f32.mrf.mxu0
        %v1304 = vadd.f32 0.0, %v1303
        %v1305 = vpop.f32.mrf.mxu0
        %v1306 = vadd.f32 0.0, %v1305
        %1307 = vmatmul.bf16.gmra.mxu0 %v1233
        %v1308 = vpop.f32.mrf.mxu0
        %v1309 = vadd.f32 0.0, %v1308
        %v1310 = vpop.f32.mrf.mxu0
        %v1311 = vadd.f32 0.0, %v1310
        %1312 = vmatmul.bf16.gmra.mxu0 %v1236
        %v1313 = vpop.f32.mrf.mxu0
        %v1314 = vadd.f32 0.0, %v1313
        %v1315 = vpop.f32.mrf.mxu0
        %v1316 = vadd.f32 0.0, %v1315
        %1317 = vmatmul.bf16.gmra.mxu0 %v1239
        %v1318 = vpop.f32.mrf.mxu0
        %v1319 = vadd.f32 0.0, %v1318
        %v1320 = vpop.f32.mrf.mxu0
        %v1321 = vadd.f32 0.0, %v1320
        %1322 = vmatmul.bf16.gmra.mxu0 %v1242
        %v1323 = vpop.f32.mrf.mxu0
        %v1324 = vadd.f32 0.0, %v1323
        %v1325 = vpop.f32.mrf.mxu0
        %v1326 = vadd.f32 0.0, %v1325
        %1327 = vmatmul.bf16.gmra.mxu0 %v1245
        %v1328 = vpop.f32.mrf.mxu0
        %v1329 = vadd.f32 0.0, %v1328
        %v1330 = vpop.f32.mrf.mxu0
        %v1331 = vadd.f32 0.0, %v1330
        %1332 = vmatmul.bf16.gmra.mxu0 %v1248
        %v1333 = vpop.f32.mrf.mxu0
        %v1334 = vadd.f32 0.0, %v1333
        %v1335 = vpop.f32.mrf.mxu0
        %v1336 = vadd.f32 0.0, %v1335
        %1337 = vmatmul.bf16.gmra.mxu0 %v1251
        %v1338 = vpop.f32.mrf.mxu0
        %v1339 = vadd.f32 0.0, %v1338
        %v1340 = vpop.f32.mrf.mxu0
        %v1341 = vadd.f32 0.0, %v1340
        %1342 = vmatmul.bf16.gmra.mxu0 %v1254
        %v1343 = vpop.f32.mrf.mxu0
        %v1344 = vadd.f32 0.0, %v1343
        %v1345 = vpop.f32.mrf.mxu0
        %v1346 = vadd.f32 0.0, %v1345
        %1347 = vdwg.mxu0
        %v1348 = vadd.f32 %v948, %v1269
        %v1349 = vadd.f32 %v950, %v1271
        %v1350 = vadd.f32 %v953, %v1274
        %v1351 = vadd.f32 %v955, %v1276
        %v1352 = vadd.f32 %v958, %v1279
        %v1353 = vadd.f32 %v960, %v1281
        %v1354 = vadd.f32 %v963, %v1284
        %v1355 = vadd.f32 %v965, %v1286
        %v1356 = vadd.f32 %v968, %v1289
        %v1357 = vadd.f32 %v970, %v1291
        %v1358 = vadd.f32 %v973, %v1294
        %v1359 = vadd.f32 %v975, %v1296
        %v1360 = vadd.f32 %v978, %v1299
        %v1361 = vadd.f32 %v980, %v1301
        %v1362 = vadd.f32 %v983, %v1304
        %v1363 = vadd.f32 %v985, %v1306
        %v1364 = vadd.f32 %v988, %v1309
        %v1365 = vadd.f32 %v990, %v1311
        %v1366 = vadd.f32 %v993, %v1314
        %v1367 = vadd.f32 %v995, %v1316
        %v1368 = vadd.f32 %v998, %v1319
        %v1369 = vadd.f32 %v1000, %v1321
        %v1370 = vadd.f32 %v1003, %v1324
        %v1371 = vadd.f32 %v1005, %v1326
        %v1372 = vadd.f32 %v1008, %v1329
        %v1373 = vadd.f32 %v1010, %v1331
        %v1374 = vadd.f32 %v1013, %v1334
        %v1375 = vadd.f32 %v1015, %v1336
        %v1376 = vadd.f32 %v1018, %v1339
        %v1377 = vadd.f32 %v1020, %v1341
        %v1378 = vadd.f32 %v1023, %v1344
        %v1379 = vadd.f32 %v1025, %v1346
        %s1380 = scalar_lea.vmem %s1, 6
        %v1381 = vld [vmem:[%s1380] sm:$0x3]
        %v1384 = vunpack.c.l.b16 %v218
        %v1385 = vunpack.c.l.b16 %v219
        %v1386 = vpack.c.b16 %v1385, %v1384
        %v1388 = vsel %vm662, %v1386, 0
        %v1391 = vand.u32 %v1381, %v714
        %1393 = vmatpush.bf16.msra.mxu0 0
        %1394 = vmatpush.bf16.msra.mxu0 0
        %1395 = vmatpush.bf16.msra.mxu0 0
        %1396 = vmatpush.bf16.msra.mxu0 0
        %1397 = vmatpush.bf16.msra.mxu0 0
        %1398 = vmatpush.bf16.msra.mxu0 0
        %1399 = vmatpush.bf16.msra.mxu0 0
        %1400 = vmatpush.bf16.msra.mxu0 %v1391
        %1401 = vmatmul.bf16.gmra.mxu0 %v891
        %v1402 = vpop.f32.mrf.mxu0
        %v1403 = vadd.f32 0.0, %v1402
        %v1404 = vpop.f32.mrf.mxu0
        %v1405 = vadd.f32 0.0, %v1404
        %1406 = vmatmul.bf16.gmra.mxu0 %v894
        %v1407 = vpop.f32.mrf.mxu0
        %v1408 = vadd.f32 0.0, %v1407
        %v1409 = vpop.f32.mrf.mxu0
        %v1410 = vadd.f32 0.0, %v1409
        %1411 = vmatmul.bf16.gmra.mxu0 %v897
        %v1412 = vpop.f32.mrf.mxu0
        %v1413 = vadd.f32 0.0, %v1412
        %v1414 = vpop.f32.mrf.mxu0
        %v1415 = vadd.f32 0.0, %v1414
        %1416 = vmatmul.bf16.gmra.mxu0 %v900
        %v1417 = vpop.f32.mrf.mxu0
        %v1418 = vadd.f32 0.0, %v1417
        %v1419 = vpop.f32.mrf.mxu0
        %v1420 = vadd.f32 0.0, %v1419
        %1421 = vmatmul.bf16.gmra.mxu0 %v903
        %v1422 = vpop.f32.mrf.mxu0
        %v1423 = vadd.f32 0.0, %v1422
        %v1424 = vpop.f32.mrf.mxu0
        %v1425 = vadd.f32 0.0, %v1424
        %1426 = vmatmul.bf16.gmra.mxu0 %v906
        %v1427 = vpop.f32.mrf.mxu0
        %v1428 = vadd.f32 0.0, %v1427
        %v1429 = vpop.f32.mrf.mxu0
        %v1430 = vadd.f32 0.0, %v1429
        %1431 = vmatmul.bf16.gmra.mxu0 %v909
        %v1432 = vpop.f32.mrf.mxu0
        %v1433 = vadd.f32 0.0, %v1432
        %v1434 = vpop.f32.mrf.mxu0
        %v1435 = vadd.f32 0.0, %v1434
        %1436 = vmatmul.bf16.gmra.mxu0 %v912
        %v1437 = vpop.f32.mrf.mxu0
        %v1438 = vadd.f32 0.0, %v1437
        %v1439 = vpop.f32.mrf.mxu0
        %v1440 = vadd.f32 0.0, %v1439
        %1441 = vmatmul.bf16.gmra.mxu0 %v915
        %v1442 = vpop.f32.mrf.mxu0
        %v1443 = vadd.f32 0.0, %v1442
        %v1444 = vpop.f32.mrf.mxu0
        %v1445 = vadd.f32 0.0, %v1444
        %1446 = vmatmul.bf16.gmra.mxu0 %v918
        %v1447 = vpop.f32.mrf.mxu0
        %v1448 = vadd.f32 0.0, %v1447
        %v1449 = vpop.f32.mrf.mxu0
        %v1450 = vadd.f32 0.0, %v1449
        %1451 = vmatmul.bf16.gmra.mxu0 %v921
        %v1452 = vpop.f32.mrf.mxu0
        %v1453 = vadd.f32 0.0, %v1452
        %v1454 = vpop.f32.mrf.mxu0
        %v1455 = vadd.f32 0.0, %v1454
        %1456 = vmatmul.bf16.gmra.mxu0 %v924
        %v1457 = vpop.f32.mrf.mxu0
        %v1458 = vadd.f32 0.0, %v1457
        %v1459 = vpop.f32.mrf.mxu0
        %v1460 = vadd.f32 0.0, %v1459
        %1461 = vmatmul.bf16.gmra.mxu0 %v927
        %v1462 = vpop.f32.mrf.mxu0
        %v1463 = vadd.f32 0.0, %v1462
        %v1464 = vpop.f32.mrf.mxu0
        %v1465 = vadd.f32 0.0, %v1464
        %1466 = vmatmul.bf16.gmra.mxu0 %v930
        %v1467 = vpop.f32.mrf.mxu0
        %v1468 = vadd.f32 0.0, %v1467
        %v1469 = vpop.f32.mrf.mxu0
        %v1470 = vadd.f32 0.0, %v1469
        %1471 = vmatmul.bf16.gmra.mxu0 %v933
        %v1472 = vpop.f32.mrf.mxu0
        %v1473 = vadd.f32 0.0, %v1472
        %v1474 = vpop.f32.mrf.mxu0
        %v1475 = vadd.f32 0.0, %v1474
        %1476 = vmatmul.bf16.gmra.mxu0 %v1388
        %v1477 = vpop.f32.mrf.mxu0
        %v1478 = vadd.f32 0.0, %v1477
        %v1479 = vpop.f32.mrf.mxu0
        %v1480 = vadd.f32 0.0, %v1479
        %1481 = vdwg.mxu0
        %v1482 = vadd.f32 %v1348, %v1403
        %v1483 = vadd.f32 %v1349, %v1405
        %v1484 = vadd.f32 %v1350, %v1408
        %v1485 = vadd.f32 %v1351, %v1410
        %v1486 = vadd.f32 %v1352, %v1413
        %v1487 = vadd.f32 %v1353, %v1415
        %v1488 = vadd.f32 %v1354, %v1418
        %v1489 = vadd.f32 %v1355, %v1420
        %v1490 = vadd.f32 %v1356, %v1423
        %v1491 = vadd.f32 %v1357, %v1425
        %v1492 = vadd.f32 %v1358, %v1428
        %v1493 = vadd.f32 %v1359, %v1430
        %v1494 = vadd.f32 %v1360, %v1433
        %v1495 = vadd.f32 %v1361, %v1435
        %v1496 = vadd.f32 %v1362, %v1438
        %v1497 = vadd.f32 %v1363, %v1440
        %v1498 = vadd.f32 %v1364, %v1443
        %v1499 = vadd.f32 %v1365, %v1445
        %v1500 = vadd.f32 %v1366, %v1448
        %v1501 = vadd.f32 %v1367, %v1450
        %v1502 = vadd.f32 %v1368, %v1453
        %v1503 = vadd.f32 %v1369, %v1455
        %v1504 = vadd.f32 %v1370, %v1458
        %v1505 = vadd.f32 %v1371, %v1460
        %v1506 = vadd.f32 %v1372, %v1463
        %v1507 = vadd.f32 %v1373, %v1465
        %v1508 = vadd.f32 %v1374, %v1468
        %v1509 = vadd.f32 %v1375, %v1470
        %v1510 = vadd.f32 %v1376, %v1473
        %v1511 = vadd.f32 %v1377, %v1475
        %v1512 = vadd.f32 %v1378, %v1478
        %v1513 = vadd.f32 %v1379, %v1480
        %s1514 = scalar_lea.vmem %s1, 8
        %v1515 = vld [vmem:[%s1514] sm:$0x3]
        %v1517 = vshrl.u32 %v218, 16
        %v1519 = vrot.slane %v1517, 4
        %v1520 = vshll.u32 %v218, 16
        %v1522 = vrot.slane %v1520, 5
        %v1523 = vor.u32 %v1519, %v1522
        %v1524 = vrot.slane %v1523, 4
        %v1526 = vshll.u32 %v219, 16
        %v1528 = vrot.slane %v1526, 5
        %v1529 = vsel %vm229, %v1524, %v1528
        %v1530 = vshrl.u32 %v219, 16
        %v1532 = vrot.slane %v1530, 4
        %v1533 = vor.u32 %v1532, %v1528
        %v1534 = vrot.slane %v1533, 4
        %v1536 = vshll.u32 %v220, 16
        %v1538 = vrot.slane %v1536, 5
        %v1539 = vsel %vm229, %v1534, %v1538
        %v1540 = vunpack.c.l.b16 %v1529
        %v1541 = vunpack.c.l.b16 %v1539
        %v1542 = vpack.c.b16 %v1541, %v1540
        %v1544 = vsel %vm662, %v1542, 0
        %v1547 = vand.u32 %v1515, %v714
        %1549 = vmatpush.bf16.msra.mxu0 0
        %1550 = vmatpush.bf16.msra.mxu0 0
        %1551 = vmatpush.bf16.msra.mxu0 0
        %1552 = vmatpush.bf16.msra.mxu0 0
        %1553 = vmatpush.bf16.msra.mxu0 0
        %1554 = vmatpush.bf16.msra.mxu0 0
        %1555 = vmatpush.bf16.msra.mxu0 0
        %1556 = vmatpush.bf16.msra.mxu0 %v1547
        %1557 = vmatmul.bf16.gmra.mxu0 %v667
        %v1558 = vpop.f32.mrf.mxu0
        %v1559 = vadd.f32 0.0, %v1558
        %v1560 = vpop.f32.mrf.mxu0
        %v1561 = vadd.f32 0.0, %v1560
        %1562 = vmatmul.bf16.gmra.mxu0 %v670
        %v1563 = vpop.f32.mrf.mxu0
        %v1564 = vadd.f32 0.0, %v1563
        %v1565 = vpop.f32.mrf.mxu0
        %v1566 = vadd.f32 0.0, %v1565
        %1567 = vmatmul.bf16.gmra.mxu0 %v673
        %v1568 = vpop.f32.mrf.mxu0
        %v1569 = vadd.f32 0.0, %v1568
        %v1570 = vpop.f32.mrf.mxu0
        %v1571 = vadd.f32 0.0, %v1570
        %1572 = vmatmul.bf16.gmra.mxu0 %v676
        %v1573 = vpop.f32.mrf.mxu0
        %v1574 = vadd.f32 0.0, %v1573
        %v1575 = vpop.f32.mrf.mxu0
        %v1576 = vadd.f32 0.0, %v1575
        %1577 = vmatmul.bf16.gmra.mxu0 %v679
        %v1578 = vpop.f32.mrf.mxu0
        %v1579 = vadd.f32 0.0, %v1578
        %v1580 = vpop.f32.mrf.mxu0
        %v1581 = vadd.f32 0.0, %v1580
        %1582 = vmatmul.bf16.gmra.mxu0 %v682
        %v1583 = vpop.f32.mrf.mxu0
        %v1584 = vadd.f32 0.0, %v1583
        %v1585 = vpop.f32.mrf.mxu0
        %v1586 = vadd.f32 0.0, %v1585
        %1587 = vmatmul.bf16.gmra.mxu0 %v685
        %v1588 = vpop.f32.mrf.mxu0
        %v1589 = vadd.f32 0.0, %v1588
        %v1590 = vpop.f32.mrf.mxu0
        %v1591 = vadd.f32 0.0, %v1590
        %1592 = vmatmul.bf16.gmra.mxu0 %v688
        %v1593 = vpop.f32.mrf.mxu0
        %v1594 = vadd.f32 0.0, %v1593
        %v1595 = vpop.f32.mrf.mxu0
        %v1596 = vadd.f32 0.0, %v1595
        %1597 = vmatmul.bf16.gmra.mxu0 %v691
        %v1598 = vpop.f32.mrf.mxu0
        %v1599 = vadd.f32 0.0, %v1598
        %v1600 = vpop.f32.mrf.mxu0
        %v1601 = vadd.f32 0.0, %v1600
        %1602 = vmatmul.bf16.gmra.mxu0 %v694
        %v1603 = vpop.f32.mrf.mxu0
        %v1604 = vadd.f32 0.0, %v1603
        %v1605 = vpop.f32.mrf.mxu0
        %v1606 = vadd.f32 0.0, %v1605
        %1607 = vmatmul.bf16.gmra.mxu0 %v697
        %v1608 = vpop.f32.mrf.mxu0
        %v1609 = vadd.f32 0.0, %v1608
        %v1610 = vpop.f32.mrf.mxu0
        %v1611 = vadd.f32 0.0, %v1610
        %1612 = vmatmul.bf16.gmra.mxu0 %v700
        %v1613 = vpop.f32.mrf.mxu0
        %v1614 = vadd.f32 0.0, %v1613
        %v1615 = vpop.f32.mrf.mxu0
        %v1616 = vadd.f32 0.0, %v1615
        %1617 = vmatmul.bf16.gmra.mxu0 %v703
        %v1618 = vpop.f32.mrf.mxu0
        %v1619 = vadd.f32 0.0, %v1618
        %v1620 = vpop.f32.mrf.mxu0
        %v1621 = vadd.f32 0.0, %v1620
        %1622 = vmatmul.bf16.gmra.mxu0 %v706
        %v1623 = vpop.f32.mrf.mxu0
        %v1624 = vadd.f32 0.0, %v1623
        %v1625 = vpop.f32.mrf.mxu0
        %v1626 = vadd.f32 0.0, %v1625
        %1627 = vmatmul.bf16.gmra.mxu0 %v709
        %v1628 = vpop.f32.mrf.mxu0
        %v1629 = vadd.f32 0.0, %v1628
        %v1630 = vpop.f32.mrf.mxu0
        %v1631 = vadd.f32 0.0, %v1630
        %1632 = vmatmul.bf16.gmra.mxu0 %v1544
        %v1633 = vpop.f32.mrf.mxu0
        %v1634 = vadd.f32 0.0, %v1633
        %v1635 = vpop.f32.mrf.mxu0
        %v1636 = vadd.f32 0.0, %v1635
        %1637 = vdwg.mxu0
        %v1638 = vadd.f32 %v1482, %v1559
        %v1639 = vadd.f32 %v1483, %v1561
        %v1640 = vadd.f32 %v1484, %v1564
        %v1641 = vadd.f32 %v1485, %v1566
        %v1642 = vadd.f32 %v1486, %v1569
        %v1643 = vadd.f32 %v1487, %v1571
        %v1644 = vadd.f32 %v1488, %v1574
        %v1645 = vadd.f32 %v1489, %v1576
        %v1646 = vadd.f32 %v1490, %v1579
        %v1647 = vadd.f32 %v1491, %v1581
        %v1648 = vadd.f32 %v1492, %v1584
        %v1649 = vadd.f32 %v1493, %v1586
        %v1650 = vadd.f32 %v1494, %v1589
        %v1651 = vadd.f32 %v1495, %v1591
        %v1652 = vadd.f32 %v1496, %v1594
        %v1653 = vadd.f32 %v1497, %v1596
        %v1654 = vadd.f32 %v1498, %v1599
        %v1655 = vadd.f32 %v1499, %v1601
        %v1656 = vadd.f32 %v1500, %v1604
        %v1657 = vadd.f32 %v1501, %v1606
        %v1658 = vadd.f32 %v1502, %v1609
        %v1659 = vadd.f32 %v1503, %v1611
        %v1660 = vadd.f32 %v1504, %v1614
        %v1661 = vadd.f32 %v1505, %v1616
        %v1662 = vadd.f32 %v1506, %v1619
        %v1663 = vadd.f32 %v1507, %v1621
        %v1664 = vadd.f32 %v1508, %v1624
        %v1665 = vadd.f32 %v1509, %v1626
        %v1666 = vadd.f32 %v1510, %v1629
        %v1667 = vadd.f32 %v1511, %v1631
        %v1668 = vadd.f32 %v1512, %v1634
        %v1669 = vadd.f32 %v1513, %v1636
        %s1670 = scalar_lea.vmem %s1, 10
        %v1671 = vld [vmem:[%s1670] sm:$0x3]
        %v1673 = vrot.slane %v218, 5
        %v1674 = vrot.slane %v1673, 4
        %v1675 = vrot.slane %v219, 5
        %v1676 = vsel %vm1047, %v1674, %v1675
        %v1677 = vrot.slane %v1675, 4
        %v1678 = vrot.slane %v220, 5
        %v1679 = vsel %vm1047, %v1677, %v1678
        %v1680 = vunpack.c.l.b16 %v1676
        %v1681 = vunpack.c.l.b16 %v1679
        %v1682 = vpack.c.b16 %v1681, %v1680
        %v1684 = vsel %vm662, %v1682, 0
        %v1687 = vand.u32 %v1671, %v714
        %1689 = vmatpush.bf16.msra.mxu0 0
        %1690 = vmatpush.bf16.msra.mxu0 0
        %1691 = vmatpush.bf16.msra.mxu0 0
        %1692 = vmatpush.bf16.msra.mxu0 0
        %1693 = vmatpush.bf16.msra.mxu0 0
        %1694 = vmatpush.bf16.msra.mxu0 0
        %1695 = vmatpush.bf16.msra.mxu0 0
        %1696 = vmatpush.bf16.msra.mxu0 %v1687
        %1697 = vmatmul.bf16.gmra.mxu0 %v1212
        %v1698 = vpop.f32.mrf.mxu0
        %v1699 = vadd.f32 0.0, %v1698
        %v1700 = vpop.f32.mrf.mxu0
        %v1701 = vadd.f32 0.0, %v1700
        %1702 = vmatmul.bf16.gmra.mxu0 %v1215
        %v1703 = vpop.f32.mrf.mxu0
        %v1704 = vadd.f32 0.0, %v1703
        %v1705 = vpop.f32.mrf.mxu0
        %v1706 = vadd.f32 0.0, %v1705
        %1707 = vmatmul.bf16.gmra.mxu0 %v1218
        %v1708 = vpop.f32.mrf.mxu0
        %v1709 = vadd.f32 0.0, %v1708
        %v1710 = vpop.f32.mrf.mxu0
        %v1711 = vadd.f32 0.0, %v1710
        %1712 = vmatmul.bf16.gmra.mxu0 %v1221
        %v1713 = vpop.f32.mrf.mxu0
        %v1714 = vadd.f32 0.0, %v1713
        %v1715 = vpop.f32.mrf.mxu0
        %v1716 = vadd.f32 0.0, %v1715
        %1717 = vmatmul.bf16.gmra.mxu0 %v1224
        %v1718 = vpop.f32.mrf.mxu0
        %v1719 = vadd.f32 0.0, %v1718
        %v1720 = vpop.f32.mrf.mxu0
        %v1721 = vadd.f32 0.0, %v1720
        %1722 = vmatmul.bf16.gmra.mxu0 %v1227
        %v1723 = vpop.f32.mrf.mxu0
        %v1724 = vadd.f32 0.0, %v1723
        %v1725 = vpop.f32.mrf.mxu0
        %v1726 = vadd.f32 0.0, %v1725
        %1727 = vmatmul.bf16.gmra.mxu0 %v1230
        %v1728 = vpop.f32.mrf.mxu0
        %v1729 = vadd.f32 0.0, %v1728
        %v1730 = vpop.f32.mrf.mxu0
        %v1731 = vadd.f32 0.0, %v1730
        %1732 = vmatmul.bf16.gmra.mxu0 %v1233
        %v1733 = vpop.f32.mrf.mxu0
        %v1734 = vadd.f32 0.0, %v1733
        %v1735 = vpop.f32.mrf.mxu0
        %v1736 = vadd.f32 0.0, %v1735
        %1737 = vmatmul.bf16.gmra.mxu0 %v1236
        %v1738 = vpop.f32.mrf.mxu0
        %v1739 = vadd.f32 0.0, %v1738
        %v1740 = vpop.f32.mrf.mxu0
        %v1741 = vadd.f32 0.0, %v1740
        %1742 = vmatmul.bf16.gmra.mxu0 %v1239
        %v1743 = vpop.f32.mrf.mxu0
        %v1744 = vadd.f32 0.0, %v1743
        %v1745 = vpop.f32.mrf.mxu0
        %v1746 = vadd.f32 0.0, %v1745
        %1747 = vmatmul.bf16.gmra.mxu0 %v1242
        %v1748 = vpop.f32.mrf.mxu0
        %v1749 = vadd.f32 0.0, %v1748
        %v1750 = vpop.f32.mrf.mxu0
        %v1751 = vadd.f32 0.0, %v1750
        %1752 = vmatmul.bf16.gmra.mxu0 %v1245
        %v1753 = vpop.f32.mrf.mxu0
        %v1754 = vadd.f32 0.0, %v1753
        %v1755 = vpop.f32.mrf.mxu0
        %v1756 = vadd.f32 0.0, %v1755
        %1757 = vmatmul.bf16.gmra.mxu0 %v1248
        %v1758 = vpop.f32.mrf.mxu0
        %v1759 = vadd.f32 0.0, %v1758
        %v1760 = vpop.f32.mrf.mxu0
        %v1761 = vadd.f32 0.0, %v1760
        %1762 = vmatmul.bf16.gmra.mxu0 %v1251
        %v1763 = vpop.f32.mrf.mxu0
        %v1764 = vadd.f32 0.0, %v1763
        %v1765 = vpop.f32.mrf.mxu0
        %v1766 = vadd.f32 0.0, %v1765
        %1767 = vmatmul.bf16.gmra.mxu0 %v1254
        %v1768 = vpop.f32.mrf.mxu0
        %v1769 = vadd.f32 0.0, %v1768
        %v1770 = vpop.f32.mrf.mxu0
        %v1771 = vadd.f32 0.0, %v1770
        %1772 = vmatmul.bf16.gmra.mxu0 %v1684
        %v1773 = vpop.f32.mrf.mxu0
        %v1774 = vadd.f32 0.0, %v1773
        %v1775 = vpop.f32.mrf.mxu0
        %v1776 = vadd.f32 0.0, %v1775
        %1777 = vdwg.mxu0
        %v1778 = vadd.f32 %v1638, %v1699
        %v1779 = vadd.f32 %v1639, %v1701
        %v1780 = vadd.f32 %v1640, %v1704
        %v1781 = vadd.f32 %v1641, %v1706
        %v1782 = vadd.f32 %v1642, %v1709
        %v1783 = vadd.f32 %v1643, %v1711
        %v1784 = vadd.f32 %v1644, %v1714
        %v1785 = vadd.f32 %v1645, %v1716
        %v1786 = vadd.f32 %v1646, %v1719
        %v1787 = vadd.f32 %v1647, %v1721
        %v1788 = vadd.f32 %v1648, %v1724
        %v1789 = vadd.f32 %v1649, %v1726
        %v1790 = vadd.f32 %v1650, %v1729
        %v1791 = vadd.f32 %v1651, %v1731
        %v1792 = vadd.f32 %v1652, %v1734
        %v1793 = vadd.f32 %v1653, %v1736
        %v1794 = vadd.f32 %v1654, %v1739
        %v1795 = vadd.f32 %v1655, %v1741
        %v1796 = vadd.f32 %v1656, %v1744
        %v1797 = vadd.f32 %v1657, %v1746
        %v1798 = vadd.f32 %v1658, %v1749
        %v1799 = vadd.f32 %v1659, %v1751
        %v1800 = vadd.f32 %v1660, %v1754
        %v1801 = vadd.f32 %v1661, %v1756
        %v1802 = vadd.f32 %v1662, %v1759
        %v1803 = vadd.f32 %v1663, %v1761
        %v1804 = vadd.f32 %v1664, %v1764
        %v1805 = vadd.f32 %v1665, %v1766
        %v1806 = vadd.f32 %v1666, %v1769
        %v1807 = vadd.f32 %v1667, %v1771
        %v1808 = vadd.f32 %v1668, %v1774
        %v1809 = vadd.f32 %v1669, %v1776
        %s1810 = scalar_lea.vmem %s1, 12
        %v1811 = vld [vmem:[%s1810] sm:$0x3]
        %v1814 = vunpack.c.l.b16 %v221
        %v1815 = vunpack.c.l.b16 %v222
        %v1816 = vpack.c.b16 %v1815, %v1814
        %v1818 = vsel %vm662, %v1816, 0
        %v1821 = vand.u32 %v1811, %v714
        %1823 = vmatpush.bf16.msra.mxu0 0
        %1824 = vmatpush.bf16.msra.mxu0 0
        %1825 = vmatpush.bf16.msra.mxu0 0
        %1826 = vmatpush.bf16.msra.mxu0 0
        %1827 = vmatpush.bf16.msra.mxu0 0
        %1828 = vmatpush.bf16.msra.mxu0 0
        %1829 = vmatpush.bf16.msra.mxu0 0
        %1830 = vmatpush.bf16.msra.mxu0 %v1821
        %1831 = vmatmul.bf16.gmra.mxu0 %v894
        %v1832 = vpop.f32.mrf.mxu0
        %v1833 = vadd.f32 0.0, %v1832
        %v1834 = vpop.f32.mrf.mxu0
        %v1835 = vadd.f32 0.0, %v1834
        %1836 = vmatmul.bf16.gmra.mxu0 %v897
        %v1837 = vpop.f32.mrf.mxu0
        %v1838 = vadd.f32 0.0, %v1837
        %v1839 = vpop.f32.mrf.mxu0
        %v1840 = vadd.f32 0.0, %v1839
        %1841 = vmatmul.bf16.gmra.mxu0 %v900
        %v1842 = vpop.f32.mrf.mxu0
        %v1843 = vadd.f32 0.0, %v1842
        %v1844 = vpop.f32.mrf.mxu0
        %v1845 = vadd.f32 0.0, %v1844
        %1846 = vmatmul.bf16.gmra.mxu0 %v903
        %v1847 = vpop.f32.mrf.mxu0
        %v1848 = vadd.f32 0.0, %v1847
        %v1849 = vpop.f32.mrf.mxu0
        %v1850 = vadd.f32 0.0, %v1849
        %1851 = vmatmul.bf16.gmra.mxu0 %v906
        %v1852 = vpop.f32.mrf.mxu0
        %v1853 = vadd.f32 0.0, %v1852
        %v1854 = vpop.f32.mrf.mxu0
        %v1855 = vadd.f32 0.0, %v1854
        %1856 = vmatmul.bf16.gmra.mxu0 %v909
        %v1857 = vpop.f32.mrf.mxu0
        %v1858 = vadd.f32 0.0, %v1857
        %v1859 = vpop.f32.mrf.mxu0
        %v1860 = vadd.f32 0.0, %v1859
        %1861 = vmatmul.bf16.gmra.mxu0 %v912
        %v1862 = vpop.f32.mrf.mxu0
        %v1863 = vadd.f32 0.0, %v1862
        %v1864 = vpop.f32.mrf.mxu0
        %v1865 = vadd.f32 0.0, %v1864
        %1866 = vmatmul.bf16.gmra.mxu0 %v915
        %v1867 = vpop.f32.mrf.mxu0
        %v1868 = vadd.f32 0.0, %v1867
        %v1869 = vpop.f32.mrf.mxu0
        %v1870 = vadd.f32 0.0, %v1869
        %1871 = vmatmul.bf16.gmra.mxu0 %v918
        %v1872 = vpop.f32.mrf.mxu0
        %v1873 = vadd.f32 0.0, %v1872
        %v1874 = vpop.f32.mrf.mxu0
        %v1875 = vadd.f32 0.0, %v1874
        %1876 = vmatmul.bf16.gmra.mxu0 %v921
        %v1877 = vpop.f32.mrf.mxu0
        %v1878 = vadd.f32 0.0, %v1877
        %v1879 = vpop.f32.mrf.mxu0
        %v1880 = vadd.f32 0.0, %v1879
        %1881 = vmatmul.bf16.gmra.mxu0 %v924
        %v1882 = vpop.f32.mrf.mxu0
        %v1883 = vadd.f32 0.0, %v1882
        %v1884 = vpop.f32.mrf.mxu0
        %v1885 = vadd.f32 0.0, %v1884
        %1886 = vmatmul.bf16.gmra.mxu0 %v927
        %v1887 = vpop.f32.mrf.mxu0
        %v1888 = vadd.f32 0.0, %v1887
        %v1889 = vpop.f32.mrf.mxu0
        %v1890 = vadd.f32 0.0, %v1889
        %1891 = vmatmul.bf16.gmra.mxu0 %v930
        %v1892 = vpop.f32.mrf.mxu0
        %v1893 = vadd.f32 0.0, %v1892
        %v1894 = vpop.f32.mrf.mxu0
        %v1895 = vadd.f32 0.0, %v1894
        %1896 = vmatmul.bf16.gmra.mxu0 %v933
        %v1897 = vpop.f32.mrf.mxu0
        %v1898 = vadd.f32 0.0, %v1897
        %v1899 = vpop.f32.mrf.mxu0
        %v1900 = vadd.f32 0.0, %v1899
        %1901 = vmatmul.bf16.gmra.mxu0 %v1388
        %v1902 = vpop.f32.mrf.mxu0
        %v1903 = vadd.f32 0.0, %v1902
        %v1904 = vpop.f32.mrf.mxu0
        %v1905 = vadd.f32 0.0, %v1904
        %1906 = vmatmul.bf16.gmra.mxu0 %v1818
        %v1907 = vpop.f32.mrf.mxu0
        %v1908 = vadd.f32 0.0, %v1907
        %v1909 = vpop.f32.mrf.mxu0
        %v1910 = vadd.f32 0.0, %v1909
        %1911 = vdwg.mxu0
        %v1912 = vadd.f32 %v1778, %v1833
        %v1913 = vadd.f32 %v1779, %v1835
        %v1914 = vadd.f32 %v1780, %v1838
        %v1915 = vadd.f32 %v1781, %v1840
        %v1916 = vadd.f32 %v1782, %v1843
        %v1917 = vadd.f32 %v1783, %v1845
        %v1918 = vadd.f32 %v1784, %v1848
        %v1919 = vadd.f32 %v1785, %v1850
        %v1920 = vadd.f32 %v1786, %v1853
        %v1921 = vadd.f32 %v1787, %v1855
        %v1922 = vadd.f32 %v1788, %v1858
        %v1923 = vadd.f32 %v1789, %v1860
        %v1924 = vadd.f32 %v1790, %v1863
        %v1925 = vadd.f32 %v1791, %v1865
        %v1926 = vadd.f32 %v1792, %v1868
        %v1927 = vadd.f32 %v1793, %v1870
        %v1928 = vadd.f32 %v1794, %v1873
        %v1929 = vadd.f32 %v1795, %v1875
        %v1930 = vadd.f32 %v1796, %v1878
        %v1931 = vadd.f32 %v1797, %v1880
        %v1932 = vadd.f32 %v1798, %v1883
        %v1933 = vadd.f32 %v1799, %v1885
        %v1934 = vadd.f32 %v1800, %v1888
        %v1935 = vadd.f32 %v1801, %v1890
        %v1936 = vadd.f32 %v1802, %v1893
        %v1937 = vadd.f32 %v1803, %v1895
        %v1938 = vadd.f32 %v1804, %v1898
        %v1939 = vadd.f32 %v1805, %v1900
        %v1940 = vadd.f32 %v1806, %v1903
        %v1941 = vadd.f32 %v1807, %v1905
        %v1942 = vadd.f32 %v1808, %v1908
        %v1943 = vadd.f32 %v1809, %v1910
        %s1944 = scalar_lea.vmem %s1, 14
        %v1945 = vld [vmem:[%s1944] sm:$0x3]
        %v1947 = vshrl.u32 %v221, 16
        %v1949 = vrot.slane %v1947, 4
        %v1950 = vshll.u32 %v221, 16
        %v1952 = vrot.slane %v1950, 5
        %v1953 = vor.u32 %v1949, %v1952
        %v1954 = vrot.slane %v1953, 4
        %v1956 = vshll.u32 %v222, 16
        %v1958 = vrot.slane %v1956, 5
        %v1959 = vsel %vm229, %v1954, %v1958
        %v1960 = vshrl.u32 %v222, 16
        %v1962 = vrot.slane %v1960, 4
        %v1963 = vor.u32 %v1962, %v1958
        %v1964 = vrot.slane %v1963, 4
        %v1966 = vshll.u32 %v223, 16
        %v1968 = vrot.slane %v1966, 5
        %v1969 = vsel %vm229, %v1964, %v1968
        %v1970 = vunpack.c.l.b16 %v1959
        %v1971 = vunpack.c.l.b16 %v1969
        %v1972 = vpack.c.b16 %v1971, %v1970
        %v1974 = vsel %vm662, %v1972, 0
        %v1977 = vand.u32 %v1945, %v714
        %1979 = vmatpush.bf16.msra.mxu0 0
        %1980 = vmatpush.bf16.msra.mxu0 0
        %1981 = vmatpush.bf16.msra.mxu0 0
        %1982 = vmatpush.bf16.msra.mxu0 0
        %1983 = vmatpush.bf16.msra.mxu0 0
        %1984 = vmatpush.bf16.msra.mxu0 0
        %1985 = vmatpush.bf16.msra.mxu0 0
        %1986 = vmatpush.bf16.msra.mxu0 %v1977
        %1987 = vmatmul.bf16.gmra.mxu0 %v670
        %v1988 = vpop.f32.mrf.mxu0
        %v1989 = vadd.f32 0.0, %v1988
        %v1990 = vpop.f32.mrf.mxu0
        %v1991 = vadd.f32 0.0, %v1990
        %1992 = vmatmul.bf16.gmra.mxu0 %v673
        %v1993 = vpop.f32.mrf.mxu0
        %v1994 = vadd.f32 0.0, %v1993
        %v1995 = vpop.f32.mrf.mxu0
        %v1996 = vadd.f32 0.0, %v1995
        %1997 = vmatmul.bf16.gmra.mxu0 %v676
        %v1998 = vpop.f32.mrf.mxu0
        %v1999 = vadd.f32 0.0, %v1998
        %v2000 = vpop.f32.mrf.mxu0
        %v2001 = vadd.f32 0.0, %v2000
        %2002 = vmatmul.bf16.gmra.mxu0 %v679
        %v2003 = vpop.f32.mrf.mxu0
        %v2004 = vadd.f32 0.0, %v2003
        %v2005 = vpop.f32.mrf.mxu0
        %v2006 = vadd.f32 0.0, %v2005
        %2007 = vmatmul.bf16.gmra.mxu0 %v682
        %v2008 = vpop.f32.mrf.mxu0
        %v2009 = vadd.f32 0.0, %v2008
        %v2010 = vpop.f32.mrf.mxu0
        %v2011 = vadd.f32 0.0, %v2010
        %2012 = vmatmul.bf16.gmra.mxu0 %v685
        %v2013 = vpop.f32.mrf.mxu0
        %v2014 = vadd.f32 0.0, %v2013
        %v2015 = vpop.f32.mrf.mxu0
        %v2016 = vadd.f32 0.0, %v2015
        %2017 = vmatmul.bf16.gmra.mxu0 %v688
        %v2018 = vpop.f32.mrf.mxu0
        %v2019 = vadd.f32 0.0, %v2018
        %v2020 = vpop.f32.mrf.mxu0
        %v2021 = vadd.f32 0.0, %v2020
        %2022 = vmatmul.bf16.gmra.mxu0 %v691
        %v2023 = vpop.f32.mrf.mxu0
        %v2024 = vadd.f32 0.0, %v2023
        %v2025 = vpop.f32.mrf.mxu0
        %v2026 = vadd.f32 0.0, %v2025
        %2027 = vmatmul.bf16.gmra.mxu0 %v694
        %v2028 = vpop.f32.mrf.mxu0
        %v2029 = vadd.f32 0.0, %v2028
        %v2030 = vpop.f32.mrf.mxu0
        %v2031 = vadd.f32 0.0, %v2030
        %2032 = vmatmul.bf16.gmra.mxu0 %v697
        %v2033 = vpop.f32.mrf.mxu0
        %v2034 = vadd.f32 0.0, %v2033
        %v2035 = vpop.f32.mrf.mxu0
        %v2036 = vadd.f32 0.0, %v2035
        %2037 = vmatmul.bf16.gmra.mxu0 %v700
        %v2038 = vpop.f32.mrf.mxu0
        %v2039 = vadd.f32 0.0, %v2038
        %v2040 = vpop.f32.mrf.mxu0
        %v2041 = vadd.f32 0.0, %v2040
        %2042 = vmatmul.bf16.gmra.mxu0 %v703
        %v2043 = vpop.f32.mrf.mxu0
        %v2044 = vadd.f32 0.0, %v2043
        %v2045 = vpop.f32.mrf.mxu0
        %v2046 = vadd.f32 0.0, %v2045
        %2047 = vmatmul.bf16.gmra.mxu0 %v706
        %v2048 = vpop.f32.mrf.mxu0
        %v2049 = vadd.f32 0.0, %v2048
        %v2050 = vpop.f32.mrf.mxu0
        %v2051 = vadd.f32 0.0, %v2050
        %2052 = vmatmul.bf16.gmra.mxu0 %v709
        %v2053 = vpop.f32.mrf.mxu0
        %v2054 = vadd.f32 0.0, %v2053
        %v2055 = vpop.f32.mrf.mxu0
        %v2056 = vadd.f32 0.0, %v2055
        %2057 = vmatmul.bf16.gmra.mxu0 %v1544
        %v2058 = vpop.f32.mrf.mxu0
        %v2059 = vadd.f32 0.0, %v2058
        %v2060 = vpop.f32.mrf.mxu0
        %v2061 = vadd.f32 0.0, %v2060
        %2062 = vmatmul.bf16.gmra.mxu0 %v1974
        %v2063 = vpop.f32.mrf.mxu0
        %v2064 = vadd.f32 0.0, %v2063
        %v2065 = vpop.f32.mrf.mxu0
        %v2066 = vadd.f32 0.0, %v2065
        %2067 = vdwg.mxu0
        %v2068 = vadd.f32 %v1912, %v1989
        %v2069 = vadd.f32 %v1913, %v1991
        %v2070 = vadd.f32 %v1914, %v1994
        %v2071 = vadd.f32 %v1915, %v1996
        %v2072 = vadd.f32 %v1916, %v1999
        %v2073 = vadd.f32 %v1917, %v2001
        %v2074 = vadd.f32 %v1918, %v2004
        %v2075 = vadd.f32 %v1919, %v2006
        %v2076 = vadd.f32 %v1920, %v2009
        %v2077 = vadd.f32 %v1921, %v2011
        %v2078 = vadd.f32 %v1922, %v2014
        %v2079 = vadd.f32 %v1923, %v2016
        %v2080 = vadd.f32 %v1924, %v2019
        %v2081 = vadd.f32 %v1925, %v2021
        %v2082 = vadd.f32 %v1926, %v2024
        %v2083 = vadd.f32 %v1927, %v2026
        %v2084 = vadd.f32 %v1928, %v2029
        %v2085 = vadd.f32 %v1929, %v2031
        %v2086 = vadd.f32 %v1930, %v2034
        %v2087 = vadd.f32 %v1931, %v2036
        %v2088 = vadd.f32 %v1932, %v2039
        %v2089 = vadd.f32 %v1933, %v2041
        %v2090 = vadd.f32 %v1934, %v2044
        %v2091 = vadd.f32 %v1935, %v2046
        %v2092 = vadd.f32 %v1936, %v2049
        %v2093 = vadd.f32 %v1937, %v2051
        %v2094 = vadd.f32 %v1938, %v2054
        %v2095 = vadd.f32 %v1939, %v2056
        %v2096 = vadd.f32 %v1940, %v2059
        %v2097 = vadd.f32 %v1941, %v2061
        %v2098 = vadd.f32 %v1942, %v2064
        %v2099 = vadd.f32 %v1943, %v2066
        %s2100 = scalar_lea.vmem %s1, 16
        %v2101 = vld [vmem:[%s2100] sm:$0x3]
        %v2103 = vrot.slane %v221, 5
        %v2104 = vrot.slane %v2103, 4
        %v2105 = vrot.slane %v222, 5
        %v2106 = vsel %vm1047, %v2104, %v2105
        %v2107 = vrot.slane %v2105, 4
        %v2108 = vrot.slane %v223, 5
        %v2109 = vsel %vm1047, %v2107, %v2108
        %v2110 = vunpack.c.l.b16 %v2106
        %v2111 = vunpack.c.l.b16 %v2109
        %v2112 = vpack.c.b16 %v2111, %v2110
        %v2114 = vsel %vm662, %v2112, 0
        %v2117 = vand.u32 %v2101, %v714
        %2119 = vmatpush.bf16.msra.mxu0 0
        %2120 = vmatpush.bf16.msra.mxu0 0
        %2121 = vmatpush.bf16.msra.mxu0 0
        %2122 = vmatpush.bf16.msra.mxu0 0
        %2123 = vmatpush.bf16.msra.mxu0 0
        %2124 = vmatpush.bf16.msra.mxu0 0
        %2125 = vmatpush.bf16.msra.mxu0 0
        %2126 = vmatpush.bf16.msra.mxu0 %v2117
        %2127 = vmatmul.bf16.gmra.mxu0 %v1215
        %v2128 = vpop.f32.mrf.mxu0
        %v2129 = vadd.f32 0.0, %v2128
        %v2130 = vpop.f32.mrf.mxu0
        %v2131 = vadd.f32 0.0, %v2130
        %2132 = vmatmul.bf16.gmra.mxu0 %v1218
        %v2133 = vpop.f32.mrf.mxu0
        %v2134 = vadd.f32 0.0, %v2133
        %v2135 = vpop.f32.mrf.mxu0
        %v2136 = vadd.f32 0.0, %v2135
        %2137 = vmatmul.bf16.gmra.mxu0 %v1221
        %v2138 = vpop.f32.mrf.mxu0
        %v2139 = vadd.f32 0.0, %v2138
        %v2140 = vpop.f32.mrf.mxu0
        %v2141 = vadd.f32 0.0, %v2140
        %2142 = vmatmul.bf16.gmra.mxu0 %v1224
        %v2143 = vpop.f32.mrf.mxu0
        %v2144 = vadd.f32 0.0, %v2143
        %v2145 = vpop.f32.mrf.mxu0
        %v2146 = vadd.f32 0.0, %v2145
        %2147 = vmatmul.bf16.gmra.mxu0 %v1227
        %v2148 = vpop.f32.mrf.mxu0
        %v2149 = vadd.f32 0.0, %v2148
        %v2150 = vpop.f32.mrf.mxu0
        %v2151 = vadd.f32 0.0, %v2150
        %2152 = vmatmul.bf16.gmra.mxu0 %v1230
        %v2153 = vpop.f32.mrf.mxu0
        %v2154 = vadd.f32 0.0, %v2153
        %v2155 = vpop.f32.mrf.mxu0
        %v2156 = vadd.f32 0.0, %v2155
        %2157 = vmatmul.bf16.gmra.mxu0 %v1233
        %v2158 = vpop.f32.mrf.mxu0
        %v2159 = vadd.f32 0.0, %v2158
        %v2160 = vpop.f32.mrf.mxu0
        %v2161 = vadd.f32 0.0, %v2160
        %2162 = vmatmul.bf16.gmra.mxu0 %v1236
        %v2163 = vpop.f32.mrf.mxu0
        %v2164 = vadd.f32 0.0, %v2163
        %v2165 = vpop.f32.mrf.mxu0
        %v2166 = vadd.f32 0.0, %v2165
        %2167 = vmatmul.bf16.gmra.mxu0 %v1239
        %v2168 = vpop.f32.mrf.mxu0
        %v2169 = vadd.f32 0.0, %v2168
        %v2170 = vpop.f32.mrf.mxu0
        %v2171 = vadd.f32 0.0, %v2170
        %2172 = vmatmul.bf16.gmra.mxu0 %v1242
        %v2173 = vpop.f32.mrf.mxu0
        %v2174 = vadd.f32 0.0, %v2173
        %v2175 = vpop.f32.mrf.mxu0
        %v2176 = vadd.f32 0.0, %v2175
        %2177 = vmatmul.bf16.gmra.mxu0 %v1245
        %v2178 = vpop.f32.mrf.mxu0
        %v2179 = vadd.f32 0.0, %v2178
        %v2180 = vpop.f32.mrf.mxu0
        %v2181 = vadd.f32 0.0, %v2180
        %2182 = vmatmul.bf16.gmra.mxu0 %v1248
        %v2183 = vpop.f32.mrf.mxu0
        %v2184 = vadd.f32 0.0, %v2183
        %v2185 = vpop.f32.mrf.mxu0
        %v2186 = vadd.f32 0.0, %v2185
        %2187 = vmatmul.bf16.gmra.mxu0 %v1251
        %v2188 = vpop.f32.mrf.mxu0
        %v2189 = vadd.f32 0.0, %v2188
        %v2190 = vpop.f32.mrf.mxu0
        %v2191 = vadd.f32 0.0, %v2190
        %2192 = vmatmul.bf16.gmra.mxu0 %v1254
        %v2193 = vpop.f32.mrf.mxu0
        %v2194 = vadd.f32 0.0, %v2193
        %v2195 = vpop.f32.mrf.mxu0
        %v2196 = vadd.f32 0.0, %v2195
        %2197 = vmatmul.bf16.gmra.mxu0 %v1684
        %v2198 = vpop.f32.mrf.mxu0
        %v2199 = vadd.f32 0.0, %v2198
        %v2200 = vpop.f32.mrf.mxu0
        %v2201 = vadd.f32 0.0, %v2200
        %2202 = vmatmul.bf16.gmra.mxu0 %v2114
        %v2203 = vpop.f32.mrf.mxu0
        %v2204 = vadd.f32 0.0, %v2203
        %v2205 = vpop.f32.mrf.mxu0
        %v2206 = vadd.f32 0.0, %v2205
        %2207 = vdwg.mxu0
        %v2208 = vadd.f32 %v2068, %v2129
        %v2209 = vadd.f32 %v2069, %v2131
        %v2210 = vadd.f32 %v2070, %v2134
        %v2211 = vadd.f32 %v2071, %v2136
        %v2212 = vadd.f32 %v2072, %v2139
        %v2213 = vadd.f32 %v2073, %v2141
        %v2214 = vadd.f32 %v2074, %v2144
        %v2215 = vadd.f32 %v2075, %v2146
        %v2216 = vadd.f32 %v2076, %v2149
        %v2217 = vadd.f32 %v2077, %v2151
        %v2218 = vadd.f32 %v2078, %v2154
        %v2219 = vadd.f32 %v2079, %v2156
        %v2220 = vadd.f32 %v2080, %v2159
        %v2221 = vadd.f32 %v2081, %v2161
        %v2222 = vadd.f32 %v2082, %v2164
        %v2223 = vadd.f32 %v2083, %v2166
        %v2224 = vadd.f32 %v2084, %v2169
        %v2225 = vadd.f32 %v2085, %v2171
        %v2226 = vadd.f32 %v2086, %v2174
        %v2227 = vadd.f32 %v2087, %v2176
        %v2228 = vadd.f32 %v2088, %v2179
        %v2229 = vadd.f32 %v2089, %v2181
        %v2230 = vadd.f32 %v2090, %v2184
        %v2231 = vadd.f32 %v2091, %v2186
        %v2232 = vadd.f32 %v2092, %v2189
        %v2233 = vadd.f32 %v2093, %v2191
        %v2234 = vadd.f32 %v2094, %v2194
        %v2235 = vadd.f32 %v2095, %v2196
        %v2236 = vadd.f32 %v2096, %v2199
        %v2237 = vadd.f32 %v2097, %v2201
        %v2238 = vadd.f32 %v2098, %v2204
        %v2239 = vadd.f32 %v2099, %v2206
        %v2240 = vld [vmem:[%s2] sm:$0x1]
        %v2242 = vperm.slane %v2240, 0
        %v2244 = vadd.f32 %v2208, %v2242
        %v2245 = vadd.f32 %v2209, %v2242
        %v2246 = vadd.f32 %v2210, %v2242
        %v2247 = vadd.f32 %v2211, %v2242
        %v2248 = vadd.f32 %v2212, %v2242
        %v2249 = vadd.f32 %v2213, %v2242
        %v2250 = vadd.f32 %v2214, %v2242
        %v2251 = vadd.f32 %v2215, %v2242
        %v2252 = vadd.f32 %v2216, %v2242
        %v2253 = vadd.f32 %v2217, %v2242
        %v2254 = vadd.f32 %v2218, %v2242
        %v2255 = vadd.f32 %v2219, %v2242
        %v2256 = vadd.f32 %v2220, %v2242
        %v2257 = vadd.f32 %v2221, %v2242
        %v2258 = vadd.f32 %v2222, %v2242
        %v2259 = vadd.f32 %v2223, %v2242
        %v2260 = vadd.f32 %v2224, %v2242
        %v2261 = vadd.f32 %v2225, %v2242
        %v2262 = vadd.f32 %v2226, %v2242
        %v2263 = vadd.f32 %v2227, %v2242
        %v2264 = vadd.f32 %v2228, %v2242
        %v2265 = vadd.f32 %v2229, %v2242
        %v2266 = vadd.f32 %v2230, %v2242
        %v2267 = vadd.f32 %v2231, %v2242
        %v2268 = vadd.f32 %v2232, %v2242
        %v2269 = vadd.f32 %v2233, %v2242
        %v2270 = vadd.f32 %v2234, %v2242
        %v2271 = vadd.f32 %v2235, %v2242
        %v2272 = vadd.f32 %v2236, %v2242
        %v2273 = vadd.f32 %v2237, %v2242
        %v2274 = vadd.f32 %v2238, %v2242
        %v2275 = vadd.f32 %v2239, %v2242
        %v2276 = vpack.c.bf16 %v2244, %v2244
        %v2277 = vpack.c.bf16 %v2245, %v2245
        %v2278 = vpack.c.bf16 %v2246, %v2246
        %v2279 = vpack.c.bf16 %v2247, %v2247
        %v2280 = vpack.c.bf16 %v2248, %v2248
        %v2281 = vpack.c.bf16 %v2249, %v2249
        %v2282 = vpack.c.bf16 %v2250, %v2250
        %v2283 = vpack.c.bf16 %v2251, %v2251
        %v2284 = vpack.c.bf16 %v2252, %v2252
        %v2285 = vpack.c.bf16 %v2253, %v2253
        %v2286 = vpack.c.bf16 %v2254, %v2254
        %v2287 = vpack.c.bf16 %v2255, %v2255
        %v2288 = vpack.c.bf16 %v2256, %v2256
        %v2289 = vpack.c.bf16 %v2257, %v2257
        %v2290 = vpack.c.bf16 %v2258, %v2258
        %v2291 = vpack.c.bf16 %v2259, %v2259
        %v2292 = vpack.c.bf16 %v2260, %v2260
        %v2293 = vpack.c.bf16 %v2261, %v2261
        %v2294 = vpack.c.bf16 %v2262, %v2262
        %v2295 = vpack.c.bf16 %v2263, %v2263
        %v2296 = vpack.c.bf16 %v2264, %v2264
        %v2297 = vpack.c.bf16 %v2265, %v2265
        %v2298 = vpack.c.bf16 %v2266, %v2266
        %v2299 = vpack.c.bf16 %v2267, %v2267
        %v2300 = vpack.c.bf16 %v2268, %v2268
        %v2301 = vpack.c.bf16 %v2269, %v2269
        %v2302 = vpack.c.bf16 %v2270, %v2270
        %v2303 = vpack.c.bf16 %v2271, %v2271
        %v2304 = vpack.c.bf16 %v2272, %v2272
        %v2305 = vpack.c.bf16 %v2273, %v2273
        %v2306 = vpack.c.bf16 %v2274, %v2274
        %v2307 = vpack.c.bf16 %v2275, %v2275
        %vm2308 = vcmask 519168
        %2309 = vst.msk [vmem:[%s163] sm:$0xf] %vm2308, %v2276
        %2310 = vst.msk [vmem:[%s163 + $0x4] sm:$0xf] %vm2308, %v2277
        %2311 = vst.msk [vmem:[%s163 + $0x8] sm:$0xf] %vm2308, %v2278
        %2312 = vst.msk [vmem:[%s163 + $0xc] sm:$0xf] %vm2308, %v2279
        %2313 = vst.msk [vmem:[%s163 + $0x10] sm:$0xf] %vm2308, %v2280
        %2314 = vst.msk [vmem:[%s163 + $0x14] sm:$0xf] %vm2308, %v2281
        %2315 = vst.msk [vmem:[%s163 + $0x18] sm:$0xf] %vm2308, %v2282
        %2316 = vst.msk [vmem:[%s163 + $0x1c] sm:$0xf] %vm2308, %v2283
        %2317 = vst.msk [vmem:[%s163 + $0x20] sm:$0xf] %vm2308, %v2284
        %2318 = vst.msk [vmem:[%s163 + $0x24] sm:$0xf] %vm2308, %v2285
        %2319 = vst.msk [vmem:[%s163 + $0x28] sm:$0xf] %vm2308, %v2286
        %2320 = vst.msk [vmem:[%s163 + $0x2c] sm:$0xf] %vm2308, %v2287
        %2321 = vst.msk [vmem:[%s163 + $0x30] sm:$0xf] %vm2308, %v2288
        %2322 = vst.msk [vmem:[%s163 + $0x34] sm:$0xf] %vm2308, %v2289
        %2323 = vst.msk [vmem:[%s163 + $0x38] sm:$0xf] %vm2308, %v2290
        %2324 = vst.msk [vmem:[%s163 + $0x3c] sm:$0xf] %vm2308, %v2291
        %2325 = vst.msk [vmem:[%s163 + $0x40] sm:$0xf] %vm2308, %v2292
        %2326 = vst.msk [vmem:[%s163 + $0x44] sm:$0xf] %vm2308, %v2293
        %2327 = vst.msk [vmem:[%s163 + $0x48] sm:$0xf] %vm2308, %v2294
        %2328 = vst.msk [vmem:[%s163 + $0x4c] sm:$0xf] %vm2308, %v2295
        %2329 = vst.msk [vmem:[%s163 + $0x50] sm:$0xf] %vm2308, %v2296
        %2330 = vst.msk [vmem:[%s163 + $0x54] sm:$0xf] %vm2308, %v2297
        %2331 = vst.msk [vmem:[%s163 + $0x58] sm:$0xf] %vm2308, %v2298
        %2332 = vst.msk [vmem:[%s163 + $0x5c] sm:$0xf] %vm2308, %v2299
        %2333 = vst.msk [vmem:[%s163 + $0x60] sm:$0xf] %vm2308, %v2300
        %2334 = vst.msk [vmem:[%s163 + $0x64] sm:$0xf] %vm2308, %v2301
        %2335 = vst.msk [vmem:[%s163 + $0x68] sm:$0xf] %vm2308, %v2302
        %2336 = vst.msk [vmem:[%s163 + $0x6c] sm:$0xf] %vm2308, %v2303
        %2337 = vst.msk [vmem:[%s163 + $0x70] sm:$0xf] %vm2308, %v2304
        %2338 = vst.msk [vmem:[%s163 + $0x74] sm:$0xf] %vm2308, %v2305
        %2339 = vst.msk [vmem:[%s163 + $0x78] sm:$0xf] %vm2308, %v2306
        %2340 = vst.msk [vmem:[%s163 + $0x7c] sm:$0xf] %vm2308, %v2307
        %s2341 = sand.u32 %s93, 1
        %s2342 = scalar_lea.sflag [#allocation3], %s2341
        %s2343 = sand.u32 %s93, 1
        %s2344 = smul.addr %s2343, 128
        %s2345 = scalar_lea.vmem [#allocation2], %s2344
        // Predicated region
        $region33: #{tpu_custom_call.1} parent=31 // pred_check
          %p2346 = pneg %p103
        $region34: #{tpu_custom_call.1} parent=31 // pred_check_branch
          %2348 = sbr.rel (%p2346) target = $region36
        $region35: #{tpu_custom_call.1} parent=31 // pred_region
          %2350 = vsyncadd %s2342, 0
          %s2351 = smul.addr %s17, 32
          %s2352 = smul.addr %s2351, 4
          %s2353 = scalar_lea.hbm %s3, %s2352
          %s2354 = sshll.u32 %s2345, 4
          %s2355 = int_to_ptr.vmem [resolvable:$true] %s2354
          %s2356 = sshll.u32 %s2353, 4
          %s2357 = int_to_ptr.hbm [resolvable:$true] %s2356
          %2362 = dma.vmem_to_hbm [thread:$0]  %s2355, 2048, %s2357, %s2342, 64, 64, 4
        $region36: #{tpu_custom_call.1} parent=31 // pred_fallthru
          _
      $region32: #{tpu_custom_call.1} parent=5 // pred_fallthru
        _
      %p2363 = scmp.le.s32.totalorder 2, %s12
      // Predicated region
      $region37: #{tpu_custom_call.1} parent=5 // pred_check
        %p2364 = pneg %p2363
      $region38: #{tpu_custom_call.1} parent=5 // pred_check_branch
        %2366 = sbr.rel (%p2364) target = $region40
      $region39: #{tpu_custom_call.1} parent=5 // pred_region
        %s2367 = ssub.s32 %s12, 2
        // Predicated region
        $region41: #{tpu_custom_call.1} parent=39 // pred_check
          %p2368 = pneg %p109
        $region42: #{tpu_custom_call.1} parent=39 // pred_check_branch
          %2370 = sbr.rel (%p2368) target = $region44
        $region43: #{tpu_custom_call.1} parent=39 // pred_region
          %s2371 = sand.u32 %s94, 1
          %s2372 = scalar_lea.sflag [#allocation3], %s2371
          %s2373 = sand.u32 %s94, 1
          %s2374 = smul.addr %s2373, 128
          %s2375 = scalar_lea.vmem [#allocation2], %s2374
          %2377 = dma.done %s2372, 2048
        $region44: #{tpu_custom_call.1} parent=39 // pred_fallthru
          _
      $region40: #{tpu_custom_call.1} parent=5 // pred_fallthru
        _
    $region6: #{tpu_custom_call.1} parent=1 // loop_footer
      %s16 = sadd.s32 1, %s12
    $region7: #{tpu_custom_call.1} parent=1 // loop_footer_branch
      %11 = sbr.rel target = $region3
    $region8: #{tpu_custom_call.1} parent=1 // loop_exit
      _
    %2378 = vsyncpa [#allocation3], 1
    %s2379 = scalar_lea.sflag [#allocation3], 1
    %2380 = vsyncpa %s2379, 1

</llo_original>
